<compile_context>
chip_gen: v7x
topology: tpu7x:2x2x1
jax: 0.10.0
libtpu: 0.0.40
codegen_flags: <defaults>
</compile_context>

<pallas_src>
import functools

import jax
import jax.numpy as jnp
from jax.experimental import pallas as pl
from jax.experimental.pallas import tpu as pltpu


def _round_up(x, m):
    return (x + m - 1) // m * m


def _convlstm_kernel(comb_ref, w_ref, b_ref, c_ref, h_out_ref, c_out_ref, *,
                     hidden_dim, kernel_size, padded_width):
    """One batch element per grid step.

    comb_ref : (1, Cp, L)       bf16  zero-padded [x, h] image, flat spatial
    w_ref    : (K*K, 4*Hd, Cp)  bf16  per-tap conv weight matrices
    b_ref    : (4*Hd, 1)        f32   conv bias
    c_ref    : (1, Hd, L)       f32   current cell state (same flat layout)
    h_out_ref: (1, Hd, L)       bf16  next hidden state
    c_out_ref: (1, Hd, L)       f32   next cell state
    """
    Hd, K, Wp = hidden_dim, kernel_size, padded_width
    P = K // 2

    comb = comb_ref[0]                          # (Cp, L) bf16
    L = comb.shape[-1]
    # 32-bit lane rotates are the most robust Mosaic path; the upcast is a
    # cheap VPU op and the MXU operands are cast back to bf16 per tap.
    comb32 = comb.astype(jnp.float32)

    # K*K conv taps: tap (dy, dx) needs comb at flat offset s = (dy-P)*Wp+(dx-P).
    # roll(comb, -s) aligns that neighbour with every output lane (only the
    # discarded padded-border positions ever see wrapped data).  Each tap is a
    # shallow (4*Hd, Cp) @ (Cp, L) MXU matmul accumulated in f32 — the kernel
    # is memory-bound, so no (K*K*Cp, L) patch needs assembling in VMEM.
    acc = None
    for t in range(K * K):
        dy, dx = divmod(t, K)
        s = (dy - P) * Wp + (dx - P)
        if s == 0:
            tap = comb
        else:
            tap = pltpu.roll(comb32, (-s) % L, axis=1).astype(jnp.bfloat16)
        part = jnp.dot(w_ref[t], tap, preferred_element_type=jnp.float32)
        acc = part if acc is None else acc + part
    gates = acc + b_ref[...]                    # (4*Hd, L) f32, bias bcast over lanes

    # Gate order matches torch.split(combined_conv, hidden_dim, dim=1): i, f, o, g.
    sig = jax.nn.sigmoid(gates[:3 * Hd])        # one EUP pass over the i/f/o slab
    i = sig[:Hd]
    f = sig[Hd:2 * Hd]
    o = sig[2 * Hd:3 * Hd]
    g = jnp.tanh(gates[3 * Hd:])

    c_next = f * c_ref[0] + i * g               # f32 recurrence
    h_next = o * jnp.tanh(c_next)

    c_out_ref[0] = c_next                                   # state stays f32
    h_out_ref[0] = h_next.astype(h_out_ref.dtype)           # bf16 writeback


@functools.partial(jax.jit, static_argnums=(5,), static_argnames=("h_dtype",))
def convlstm_cell_forward(x, h_cur, c_cur, weight, bias, kernel_size,
                          h_dtype=jnp.bfloat16):
    """ConvLSTMCell.forward (NCHW in / NCHW out, PyTorch conventions).

    x      : (B, input_dim, H, W)
    h_cur  : (B, hidden_dim, H, W)
    c_cur  : (B, hidden_dim, H, W)
    weight : (4*hidden_dim, input_dim + hidden_dim, K, K)   (PyTorch OIHW)
    bias   : (4*hidden_dim,)
    returns (h_next, c_next): h_next in `h_dtype` (bf16 by default — it is the
    next step's matmul-operand dtype), c_next always f32.
    """
    B, Ci, H, W = x.shape
    Hd = h_cur.shape[1]
    K = kernel_size
    P = K // 2
    Cin = Ci + Hd
    Hp, Wp = H + 2 * P, W + 2 * P
    S = Hp * Wp                        # flat padded spatial size
    L = _round_up(S, 128)              # lane-dense flat length (128 multiple)
    Cp = _round_up(Cin, 16)            # bf16 sublane pack

    # --- activations: cast to bf16 FIRST, then zero-pad once ----------------
    comb = jnp.concatenate(
        [x.astype(jnp.bfloat16), h_cur.astype(jnp.bfloat16)], axis=1)
    comb = jnp.pad(comb, ((0, 0), (0, Cp - Cin), (P, P), (P, P)))
    comb = comb.reshape(B, Cp, S)
    comb = jnp.pad(comb, ((0, 0), (0, 0), (0, L - S)))            # (B, Cp, L)

    # cell state in the same flat padded layout, pinned to f32
    c_flat = jnp.pad(c_cur.astype(jnp.float32),
                     ((0, 0), (0, 0), (P, P), (P, P))).reshape(B, Hd, S)
    c_flat = jnp.pad(c_flat, ((0, 0), (0, 0), (0, L - S)))        # (B, Hd, L)

    # --- parameters: OIHW -> per-tap (4*Hd, Cp) matmul matrices --------------
    w_taps = jnp.transpose(weight, (2, 3, 0, 1)).reshape(K * K, 4 * Hd, Cin)
    w_taps = jnp.pad(w_taps, ((0, 0), (0, 0), (0, Cp - Cin))).astype(jnp.bfloat16)
    b_col = bias.reshape(4 * Hd, 1).astype(jnp.float32)

    # --- VMEM budget from the static block sizes (v7x-safe 60 MiB cap) -------
    bytes_per_step = (
        2 * (Cp * L * 2)                     # double-buffered comb (bf16)
        + 2 * (Hd * L * 4)                   # double-buffered c_cur (f32)
        + 2 * (Hd * L * 2 + Hd * L * 4)      # double-buffered h (bf16) / c (f32) out
        + K * K * 4 * Hd * Cp * 2            # resident tap weights (bf16)
        + 4 * Hd * L * 4                     # f32 gate accumulator
        + 6 * Cp * L * 4)                    # rolled-tap / upcast temporaries
    vmem_limit = int(min(max(2 * bytes_per_step, 32 * 1024 * 1024),
                         60 * 1024 * 1024))

    kern = functools.partial(_convlstm_kernel, hidden_dim=Hd,
                             kernel_size=K, padded_width=Wp)

    h_flat, c_next_flat = pl.pallas_call(
        kern,
        grid=(B,),
        in_specs=[
            pl.BlockSpec((1, Cp, L), lambda b: (b, 0, 0)),
            pl.BlockSpec((K * K, 4 * Hd, Cp), lambda b: (0, 0, 0)),
            pl.BlockSpec((4 * Hd, 1), lambda b: (0, 0)),
            pl.BlockSpec((1, Hd, L), lambda b: (b, 0, 0)),
        ],
        out_specs=[
            pl.BlockSpec((1, Hd, L), lambda b: (b, 0, 0)),
            pl.BlockSpec((1, Hd, L), lambda b: (b, 0, 0)),
        ],
        out_shape=[
            jax.ShapeDtypeStruct((B, Hd, L), h_dtype),
            jax.ShapeDtypeStruct((B, Hd, L), jnp.float32),
        ],
        compiler_params=pltpu.CompilerParams(
            dimension_semantics=("parallel",),
            vmem_limit_bytes=vmem_limit,
        ),
    )(comb, w_taps, b_col, c_flat)

    # drop the padded border / lane padding (interior of the padded image)
    h_next = h_flat[:, :, :S].reshape(B, Hd, Hp, Wp)[:, :, P:P + H, P:P + W]
    c_next = c_next_flat[:, :, :S].reshape(B, Hd, Hp, Wp)[:, :, P:P + H, P:P + W]
    return h_next, c_next


def _reference_forward(x, h_cur, c_cur, weight, bias, kernel_size):
    """Pure-JAX f32 reference mirroring the PyTorch module (NCHW)."""
    P = kernel_size // 2
    comb = jnp.concatenate([x, h_cur], axis=1)
    out = jax.lax.conv_general_dilated(
        comb, weight, window_strides=(1, 1),
        padding=[(P, P), (P, P)],
        dimension_numbers=("NCHW", "OIHW", "NCHW"))
    out = out + bias[None, :, None, None]
    cc_i, cc_f, cc_o, cc_g = jnp.split(out, 4, axis=1)
    i = jax.nn.sigmoid(cc_i)
    f = jax.nn.sigmoid(cc_f)
    o = jax.nn.sigmoid(cc_o)
    g = jnp.tanh(cc_g)
    c_next = f * c_cur + i * g
    h_next = o * jnp.tanh(c_next)
    return h_next, c_next


if __name__ == "__main__":
    # ConvLSTMCell(input_dim=4, hidden_dim=8, kernel_size=3), 16x16 spatial, batch 2.
    B, Ci, Hd, H, W, K = 2, 4, 8, 16, 16, 3
    Cin = Ci + Hd

    key = jax.random.PRNGKey(0)
    kx, kh, kc, kw, kb = jax.random.split(key, 5)
    x = jax.random.normal(kx, (B, Ci, H, W), jnp.float32)
    h_cur = jax.random.normal(kh, (B, Hd, H, W), jnp.float32)
    c_cur = jax.random.normal(kc, (B, Hd, H, W), jnp.float32)
    # Deterministic synthetic conv parameters (PyTorch layout: OIHW, bias (4*Hd,)).
    weight = 0.1 * jax.random.normal(kw, (4 * Hd, Cin, K, K), jnp.float32)
    bias = 0.1 * jax.random.normal(kb, (4 * Hd,), jnp.float32)

    h_next, c_next = convlstm_cell_forward(x, h_cur, c_cur, weight, bias, K)
    h_next = jax.block_until_ready(h_next)
    c_next = jax.block_until_ready(c_next)

    h_ref, c_ref = _reference_forward(x, h_cur, c_cur, weight, bias, K)
    assert h_next.shape == (B, Hd, H, W) and c_next.shape == (B, Hd, H, W)
    assert c_next.dtype == jnp.float32            # recurrent state never truncates
    # bf16 MXU operands (f32 accumulation) + bf16 h writeback: expected deviation
    # vs the f32 reference is O(1e-3); any structural bug (gate order, tap/roll
    # alignment, bias) would be O(1).
    assert jnp.allclose(h_next, h_ref, atol=2e-2, rtol=2e-2)
    assert jnp.allclose(c_next, c_ref, atol=2e-2, rtol=2e-2)

    print("KERNEL_OK")
</pallas_src>

<mosaic_0001>
module attributes {stable_mosaic.version = 11 : i64} {
  func.func @_convlstm_kernel(%arg0: i32, %arg1: memref<1x16x384xbf16, #tpu.memory_space<vmem>>, %arg2: memref<9x32x16xbf16, #tpu.memory_space<vmem>>, %arg3: memref<32x1xf32, #tpu.memory_space<vmem>>, %arg4: memref<1x8x384xf32, #tpu.memory_space<vmem>>, %arg5: memref<1x8x384xbf16, #tpu.memory_space<vmem>>, %arg6: memref<1x8x384xf32, #tpu.memory_space<vmem>>) attributes {dimension_semantics = [#tpu.dimension_semantics<parallel>], iteration_bounds = array<i64: 2>, scalar_prefetch = 0 : i64, scratch_operands = 0 : i64, tpu.core_type = #tpu.core_type<tc>, window_params = [{transform_indices = @transform_0, window_bounds = array<i64: 1, 16, 384>}, {pipeline_mode = #tpu.pipeline_mode<synchronous>, transform_indices = @transform_1, window_bounds = array<i64: 9, 32, 16>}, {pipeline_mode = #tpu.pipeline_mode<synchronous>, transform_indices = @transform_2, window_bounds = array<i64: 32, 1>}, {transform_indices = @transform_3, window_bounds = array<i64: 1, 8, 384>}, {transform_indices = @transform_4, window_bounds = array<i64: 1, 8, 384>}, {transform_indices = @transform_5, window_bounds = array<i64: 1, 8, 384>}]} {
    %c0 = arith.constant 0 : index
    %c0_0 = arith.constant 0 : index
    %c0_1 = arith.constant 0 : index
    %0 = vector.load %arg1[%c0, %c0_0, %c0_1] : memref<1x16x384xbf16, #tpu.memory_space<vmem>>, vector<1x16x384xbf16>
    %1 = vector.shape_cast %0 : vector<1x16x384xbf16> to vector<16x384xbf16>
    %2 = arith.extf %1 : vector<16x384xbf16> to vector<16x384xf32>
    %c19_i32 = arith.constant 19 : i32
    %3 = tpu.dynamic_rotate %2 by %c19_i32 dim 1 : vector<16x384xf32>, i32 -> vector<16x384xf32>
    %4 = arith.truncf %3 : vector<16x384xf32> to vector<16x384xbf16>
    %c0_2 = arith.constant 0 : index
    %c0_3 = arith.constant 0 : index
    %c0_4 = arith.constant 0 : index
    %5 = vector.load %arg2[%c0_2, %c0_3, %c0_4] : memref<9x32x16xbf16, #tpu.memory_space<vmem>>, vector<1x32x16xbf16>
    %6 = vector.shape_cast %5 : vector<1x32x16xbf16> to vector<32x16xbf16>
    %cst = arith.constant dense<0.000000e+00> : vector<32x384xf32>
    %7 = tpu.matmul %6, %4, %cst {dimension_numbers = #tpu.dot_dimension_numbers<[1], [0], [0], [1], [0, 0, 1, 1], [], []>} : vector<32x16xbf16>, vector<16x384xbf16>, vector<32x384xf32> -> vector<32x384xf32>
    %c18_i32 = arith.constant 18 : i32
    %8 = tpu.dynamic_rotate %2 by %c18_i32 dim 1 : vector<16x384xf32>, i32 -> vector<16x384xf32>
    %9 = arith.truncf %8 : vector<16x384xf32> to vector<16x384xbf16>
    %c1 = arith.constant 1 : index
    %c0_5 = arith.constant 0 : index
    %c0_6 = arith.constant 0 : index
    %10 = vector.load %arg2[%c1, %c0_5, %c0_6] : memref<9x32x16xbf16, #tpu.memory_space<vmem>>, vector<1x32x16xbf16>
    %11 = vector.shape_cast %10 : vector<1x32x16xbf16> to vector<32x16xbf16>
    %cst_7 = arith.constant dense<0.000000e+00> : vector<32x384xf32>
    %12 = tpu.matmul %11, %9, %cst_7 {dimension_numbers = #tpu.dot_dimension_numbers<[1], [0], [0], [1], [0, 0, 1, 1], [], []>} : vector<32x16xbf16>, vector<16x384xbf16>, vector<32x384xf32> -> vector<32x384xf32>
    %13 = arith.addf %7, %12 : vector<32x384xf32>
    %c17_i32 = arith.constant 17 : i32
    %14 = tpu.dynamic_rotate %2 by %c17_i32 dim 1 : vector<16x384xf32>, i32 -> vector<16x384xf32>
    %15 = arith.truncf %14 : vector<16x384xf32> to vector<16x384xbf16>
    %c2 = arith.constant 2 : index
    %c0_8 = arith.constant 0 : index
    %c0_9 = arith.constant 0 : index
    %16 = vector.load %arg2[%c2, %c0_8, %c0_9] : memref<9x32x16xbf16, #tpu.memory_space<vmem>>, vector<1x32x16xbf16>
    %17 = vector.shape_cast %16 : vector<1x32x16xbf16> to vector<32x16xbf16>
    %cst_10 = arith.constant dense<0.000000e+00> : vector<32x384xf32>
    %18 = tpu.matmul %17, %15, %cst_10 {dimension_numbers = #tpu.dot_dimension_numbers<[1], [0], [0], [1], [0, 0, 1, 1], [], []>} : vector<32x16xbf16>, vector<16x384xbf16>, vector<32x384xf32> -> vector<32x384xf32>
    %19 = arith.addf %13, %18 : vector<32x384xf32>
    %c1_i32 = arith.constant 1 : i32
    %20 = tpu.dynamic_rotate %2 by %c1_i32 dim 1 : vector<16x384xf32>, i32 -> vector<16x384xf32>
    %21 = arith.truncf %20 : vector<16x384xf32> to vector<16x384xbf16>
    %c3 = arith.constant 3 : index
    %c0_11 = arith.constant 0 : index
    %c0_12 = arith.constant 0 : index
    %22 = vector.load %arg2[%c3, %c0_11, %c0_12] : memref<9x32x16xbf16, #tpu.memory_space<vmem>>, vector<1x32x16xbf16>
    %23 = vector.shape_cast %22 : vector<1x32x16xbf16> to vector<32x16xbf16>
    %cst_13 = arith.constant dense<0.000000e+00> : vector<32x384xf32>
    %24 = tpu.matmul %23, %21, %cst_13 {dimension_numbers = #tpu.dot_dimension_numbers<[1], [0], [0], [1], [0, 0, 1, 1], [], []>} : vector<32x16xbf16>, vector<16x384xbf16>, vector<32x384xf32> -> vector<32x384xf32>
    %25 = arith.addf %19, %24 : vector<32x384xf32>
    %c4 = arith.constant 4 : index
    %c0_14 = arith.constant 0 : index
    %c0_15 = arith.constant 0 : index
    %26 = vector.load %arg2[%c4, %c0_14, %c0_15] : memref<9x32x16xbf16, #tpu.memory_space<vmem>>, vector<1x32x16xbf16>
    %27 = vector.shape_cast %26 : vector<1x32x16xbf16> to vector<32x16xbf16>
    %cst_16 = arith.constant dense<0.000000e+00> : vector<32x384xf32>
    %28 = tpu.matmul %27, %1, %cst_16 {dimension_numbers = #tpu.dot_dimension_numbers<[1], [0], [0], [1], [0, 0, 1, 1], [], []>} : vector<32x16xbf16>, vector<16x384xbf16>, vector<32x384xf32> -> vector<32x384xf32>
    %29 = arith.addf %25, %28 : vector<32x384xf32>
    %c383_i32 = arith.constant 383 : i32
    %30 = tpu.dynamic_rotate %2 by %c383_i32 dim 1 : vector<16x384xf32>, i32 -> vector<16x384xf32>
    %31 = arith.truncf %30 : vector<16x384xf32> to vector<16x384xbf16>
    %c5 = arith.constant 5 : index
    %c0_17 = arith.constant 0 : index
    %c0_18 = arith.constant 0 : index
    %32 = vector.load %arg2[%c5, %c0_17, %c0_18] : memref<9x32x16xbf16, #tpu.memory_space<vmem>>, vector<1x32x16xbf16>
    %33 = vector.shape_cast %32 : vector<1x32x16xbf16> to vector<32x16xbf16>
    %cst_19 = arith.constant dense<0.000000e+00> : vector<32x384xf32>
    %34 = tpu.matmul %33, %31, %cst_19 {dimension_numbers = #tpu.dot_dimension_numbers<[1], [0], [0], [1], [0, 0, 1, 1], [], []>} : vector<32x16xbf16>, vector<16x384xbf16>, vector<32x384xf32> -> vector<32x384xf32>
    %35 = arith.addf %29, %34 : vector<32x384xf32>
    %c367_i32 = arith.constant 367 : i32
    %36 = tpu.dynamic_rotate %2 by %c367_i32 dim 1 : vector<16x384xf32>, i32 -> vector<16x384xf32>
    %37 = arith.truncf %36 : vector<16x384xf32> to vector<16x384xbf16>
    %c6 = arith.constant 6 : index
    %c0_20 = arith.constant 0 : index
    %c0_21 = arith.constant 0 : index
    %38 = vector.load %arg2[%c6, %c0_20, %c0_21] : memref<9x32x16xbf16, #tpu.memory_space<vmem>>, vector<1x32x16xbf16>
    %39 = vector.shape_cast %38 : vector<1x32x16xbf16> to vector<32x16xbf16>
    %cst_22 = arith.constant dense<0.000000e+00> : vector<32x384xf32>
    %40 = tpu.matmul %39, %37, %cst_22 {dimension_numbers = #tpu.dot_dimension_numbers<[1], [0], [0], [1], [0, 0, 1, 1], [], []>} : vector<32x16xbf16>, vector<16x384xbf16>, vector<32x384xf32> -> vector<32x384xf32>
    %41 = arith.addf %35, %40 : vector<32x384xf32>
    %c366_i32 = arith.constant 366 : i32
    %42 = tpu.dynamic_rotate %2 by %c366_i32 dim 1 : vector<16x384xf32>, i32 -> vector<16x384xf32>
    %43 = arith.truncf %42 : vector<16x384xf32> to vector<16x384xbf16>
    %c7 = arith.constant 7 : index
    %c0_23 = arith.constant 0 : index
    %c0_24 = arith.constant 0 : index
    %44 = vector.load %arg2[%c7, %c0_23, %c0_24] : memref<9x32x16xbf16, #tpu.memory_space<vmem>>, vector<1x32x16xbf16>
    %45 = vector.shape_cast %44 : vector<1x32x16xbf16> to vector<32x16xbf16>
    %cst_25 = arith.constant dense<0.000000e+00> : vector<32x384xf32>
    %46 = tpu.matmul %45, %43, %cst_25 {dimension_numbers = #tpu.dot_dimension_numbers<[1], [0], [0], [1], [0, 0, 1, 1], [], []>} : vector<32x16xbf16>, vector<16x384xbf16>, vector<32x384xf32> -> vector<32x384xf32>
    %47 = arith.addf %41, %46 : vector<32x384xf32>
    %c365_i32 = arith.constant 365 : i32
    %48 = tpu.dynamic_rotate %2 by %c365_i32 dim 1 : vector<16x384xf32>, i32 -> vector<16x384xf32>
    %49 = arith.truncf %48 : vector<16x384xf32> to vector<16x384xbf16>
    %c8 = arith.constant 8 : index
    %c0_26 = arith.constant 0 : index
    %c0_27 = arith.constant 0 : index
    %50 = vector.load %arg2[%c8, %c0_26, %c0_27] : memref<9x32x16xbf16, #tpu.memory_space<vmem>>, vector<1x32x16xbf16>
    %51 = vector.shape_cast %50 : vector<1x32x16xbf16> to vector<32x16xbf16>
    %cst_28 = arith.constant dense<0.000000e+00> : vector<32x384xf32>
    %52 = tpu.matmul %51, %49, %cst_28 {dimension_numbers = #tpu.dot_dimension_numbers<[1], [0], [0], [1], [0, 0, 1, 1], [], []>} : vector<32x16xbf16>, vector<16x384xbf16>, vector<32x384xf32> -> vector<32x384xf32>
    %53 = arith.addf %47, %52 : vector<32x384xf32>
    %c0_29 = arith.constant 0 : index
    %c0_30 = arith.constant 0 : index
    %54 = vector.load %arg3[%c0_29, %c0_30] : memref<32x1xf32, #tpu.memory_space<vmem>>, vector<32x1xf32>
    %55 = vector.broadcast %54 : vector<32x1xf32> to vector<32x384xf32>
    %56 = arith.addf %53, %55 : vector<32x384xf32>
    %57 = vector.extract_strided_slice %56 {offsets = [0, 0], sizes = [24, 384], strides = [1, 1]} : vector<32x384xf32> to vector<24x384xf32>
    %58 = arith.negf %57 : vector<24x384xf32>
    %59 = math.exp %58 : vector<24x384xf32>
    %cst_31 = arith.constant 1.000000e+00 : f32
    %60 = vector.broadcast %cst_31 : f32 to vector<24x384xf32>
    %61 = arith.addf %60, %59 : vector<24x384xf32>
    %62 = arith.divf %60, %61 : vector<24x384xf32>
    %63 = vector.extract_strided_slice %62 {offsets = [0, 0], sizes = [8, 384], strides = [1, 1]} : vector<24x384xf32> to vector<8x384xf32>
    %64 = vector.extract_strided_slice %62 {offsets = [8, 0], sizes = [8, 384], strides = [1, 1]} : vector<24x384xf32> to vector<8x384xf32>
    %65 = vector.extract_strided_slice %62 {offsets = [16, 0], sizes = [8, 384], strides = [1, 1]} : vector<24x384xf32> to vector<8x384xf32>
    %66 = vector.extract_strided_slice %56 {offsets = [24, 0], sizes = [8, 384], strides = [1, 1]} : vector<32x384xf32> to vector<8x384xf32>
    %67 = math.tanh %66 : vector<8x384xf32>
    %c0_32 = arith.constant 0 : index
    %c0_33 = arith.constant 0 : index
    %c0_34 = arith.constant 0 : index
    %68 = vector.load %arg4[%c0_32, %c0_33, %c0_34] : memref<1x8x384xf32, #tpu.memory_space<vmem>>, vector<1x8x384xf32>
    %69 = vector.shape_cast %68 : vector<1x8x384xf32> to vector<8x384xf32>
    %70 = arith.mulf %64, %69 : vector<8x384xf32>
    %71 = arith.mulf %63, %67 : vector<8x384xf32>
    %72 = arith.addf %70, %71 : vector<8x384xf32>
    %73 = math.tanh %72 : vector<8x384xf32>
    %74 = arith.mulf %65, %73 : vector<8x384xf32>
    %c0_35 = arith.constant 0 : index
    %c0_36 = arith.constant 0 : index
    %c0_37 = arith.constant 0 : index
    %75 = vector.load %arg6[%c0_35, %c0_36, %c0_37] : memref<1x8x384xf32, #tpu.memory_space<vmem>>, vector<1x8x384xf32>
    %76 = vector.shape_cast %75 : vector<1x8x384xf32> to vector<8x384xf32>
    %77 = vector.shape_cast %72 : vector<8x384xf32> to vector<1x8x384xf32>
    tpu.vector_store %arg6[%c0_35, %c0_36, %c0_37], %77 {strides = array<i32>} : memref<1x8x384xf32, #tpu.memory_space<vmem>>, vector<1x8x384xf32>,
    %78 = arith.truncf %74 : vector<8x384xf32> to vector<8x384xbf16>
    %c0_38 = arith.constant 0 : index
    %c0_39 = arith.constant 0 : index
    %c0_40 = arith.constant 0 : index
    %79 = vector.load %arg5[%c0_38, %c0_39, %c0_40] : memref<1x8x384xbf16, #tpu.memory_space<vmem>>, vector<1x8x384xbf16>
    %80 = vector.shape_cast %79 : vector<1x8x384xbf16> to vector<8x384xbf16>
    %81 = vector.shape_cast %78 : vector<8x384xbf16> to vector<1x8x384xbf16>
    tpu.vector_store %arg5[%c0_38, %c0_39, %c0_40], %81 {strides = array<i32>} : memref<1x8x384xbf16, #tpu.memory_space<vmem>>, vector<1x8x384xbf16>,
    return
  }
  func.func @transform_0(%arg0: i32) -> (i32, i32, i32) {
    %c0_i32 = arith.constant 0 : i32
    %c0_i32_0 = arith.constant 0 : i32
    %c0_i32_1 = arith.constant 0 : i32
    return %arg0, %c0_i32, %c0_i32_0 : i32, i32, i32
  }
  func.func @transform_1(%arg0: i32) -> (i32, i32, i32) {
    %c0_i32 = arith.constant 0 : i32
    %c0_i32_0 = arith.constant 0 : i32
    %c0_i32_1 = arith.constant 0 : i32
    %c0_i32_2 = arith.constant 0 : i32
    return %c0_i32, %c0_i32_0, %c0_i32_1 : i32, i32, i32
  }
  func.func @transform_2(%arg0: i32) -> (i32, i32) {
    %c0_i32 = arith.constant 0 : i32
    %c0_i32_0 = arith.constant 0 : i32
    %c0_i32_1 = arith.constant 0 : i32
    return %c0_i32, %c0_i32_0 : i32, i32
  }
  func.func @transform_3(%arg0: i32) -> (i32, i32, i32) {
    %c0_i32 = arith.constant 0 : i32
    %c0_i32_0 = arith.constant 0 : i32
    %c0_i32_1 = arith.constant 0 : i32
    return %arg0, %c0_i32, %c0_i32_0 : i32, i32, i32
  }
  func.func @transform_4(%arg0: i32) -> (i32, i32, i32) {
    %c0_i32 = arith.constant 0 : i32
    %c0_i32_0 = arith.constant 0 : i32
    %c0_i32_1 = arith.constant 0 : i32
    return %arg0, %c0_i32, %c0_i32_0 : i32, i32, i32
  }
  func.func @transform_5(%arg0: i32) -> (i32, i32, i32) {
    %c0_i32 = arith.constant 0 : i32
    %c0_i32_0 = arith.constant 0 : i32
    %c0_i32_1 = arith.constant 0 : i32
    return %arg0, %c0_i32, %c0_i32_0 : i32, i32, i32
  }
}

</mosaic_0001>

<llo_original>
// kernel: convlstm_cell_forward.1
$region0: #{convlstm_cell_forward.1}
  #allocation0 [shape = 'u32[]', space=smem, size = 0x4, offset = 0x4, fixed_abs, tag = 'smem constant byte address 0x4 - core index']
  #allocation1 [shape = 'u32[144,128]{1,0:T(1,128)}', space=vmem, size = 0x12000, scoped, tag = 'internal scratch']
  %s0 = inlined_call_operand.vmem [shape: bf16[2,16,384], index: 0, kind: input, shape index: {}]
  %s1 = inlined_call_operand.vmem [shape: bf16[9,32,16], index: 1, kind: input, shape index: {}]
  %s2 = inlined_call_operand.vmem [shape: f32[32,1], index: 2, kind: input, shape index: {}]
  %s3 = inlined_call_operand.vmem [shape: f32[2,8,384], index: 3, kind: input, shape index: {}]
  %s4 = inlined_call_operand.vmem [shape: bf16[2,8,384], index: 4, kind: output, shape index: {0}]
  %s5 = inlined_call_operand.vmem [shape: f32[2,8,384], index: 5, kind: output, shape index: {1}]
  %6 = xla_tuple %s4, %s5
  %s7 = sld [smem:[#allocation0]]
  $region57: #{convlstm_cell_forward.1} parent=0
    _
  %s9 = ssub.s32 1, %s7
  %s10 = scalar_select 0, %s9, %s7
  loop: start=0, step=1, limit=4
  $region2: #{convlstm_cell_forward.1} parent=0 // loop_pre_header
    _
  $region3: #{convlstm_cell_forward.1} parent=0 // loop_header
    %s12 = sphi 0, %s16
    %p13 = scmp.ge.s32.totalorder %s12, 4
    %s22 = sphi 0, %s24
    %s25 = sphi 0, %s22
    %s26 = sphi 0, %s25
    %s42 = sphi 0, %s26
    %s46 = sphi 0, %s46
    %s48 = sphi 0, %s46
    %s49 = sphi 0, %s48
    %s63 = sphi 0, %s49
    %s67 = sphi 0, %s67
    %s69 = sphi 0, %s67
    %s70 = sphi 0, %s69
    %s84 = sphi 0, %s70
    %s90 = sphi 0, %s92
    %s93 = sphi 0, %s90
    %s94 = sphi 0, %s93
    %s110 = sphi 0, %s94
    %s116 = sphi 0, %s118
    %s119 = sphi 0, %s116
    %s120 = sphi 0, %s119
    %s136 = sphi 0, %s120
    %s142 = sphi 0, %s144
    %s145 = sphi 0, %s142
    %s146 = sphi 0, %s145
    %s162 = sphi 0, %s146
  $region4: #{convlstm_cell_forward.1} parent=0 // loop_header_branch
    %15 = sbr.rel (%p13) target = $region8
  $region5: #{convlstm_cell_forward.1} parent=0 // loop_body
    %s17 = ssub.s32 %s12, 1
    %s18 = ssub.s32 %s12, 2
    %s19 = sadd.s32 %s12, 1
    %s20 = ssub.s32 %s12, %s19
    %p21 = scmp.eq.s32.totalorder %s20, 0
    %s23 = sadd.s32 %s22, 1
    %s24 = scalar_select %p21, %s22, %s23
    %p27 = pneg %p21
    %p28 = scmp.eq.s32.totalorder %s12, 1
    %p29 = por %p27, %p28
    %p30 = scmp.ne.s32.totalorder %s22, %s25
    %p31 = scmp.eq.s32.totalorder %s12, 0
    %p32 = por %p30, %p31
    %p33 = scmp.ne.s32.totalorder %s22, %s25
    %p34 = scmp.eq.s32.totalorder %s17, 1
    %p35 = por %p33, %p34
    %p36 = scmp.ne.s32.totalorder %s25, %s26
    %p37 = scmp.eq.s32.totalorder %s17, 0
    %p38 = por %p36, %p37
    %p39 = scmp.ne.s32.totalorder %s25, %s26
    %p40 = scmp.eq.s32.totalorder %s18, 1
    %p41 = por %p39, %p40
    %p43 = scmp.ne.s32.totalorder %s26, %s42
    %p44 = scmp.eq.s32.totalorder %s18, 0
    %p45 = por %p43, %p44
    %s47 = sadd.s32 %s46, 1
    %p50 = scmp.eq.s32.totalorder %s12, 1
    %p51 = scmp.ne.s32.totalorder %s46, %s48
    %p52 = scmp.eq.s32.totalorder %s12, 0
    %p53 = por %p51, %p52
    %p54 = scmp.ne.s32.totalorder %s46, %s48
    %p55 = scmp.eq.s32.totalorder %s17, 1
    %p56 = por %p54, %p55
    %p57 = scmp.ne.s32.totalorder %s48, %s49
    %p58 = scmp.eq.s32.totalorder %s17, 0
    %p59 = por %p57, %p58
    %p60 = scmp.ne.s32.totalorder %s48, %s49
    %p61 = scmp.eq.s32.totalorder %s18, 1
    %p62 = por %p60, %p61
    %p64 = scmp.ne.s32.totalorder %s49, %s63
    %p65 = scmp.eq.s32.totalorder %s18, 0
    %p66 = por %p64, %p65
    %s68 = sadd.s32 %s67, 1
    %p71 = scmp.eq.s32.totalorder %s12, 1
    %p72 = scmp.ne.s32.totalorder %s67, %s69
    %p73 = scmp.eq.s32.totalorder %s12, 0
    %p74 = por %p72, %p73
    %p75 = scmp.ne.s32.totalorder %s67, %s69
    %p76 = scmp.eq.s32.totalorder %s17, 1
    %p77 = por %p75, %p76
    %p78 = scmp.ne.s32.totalorder %s69, %s70
    %p79 = scmp.eq.s32.totalorder %s17, 0
    %p80 = por %p78, %p79
    %p81 = scmp.ne.s32.totalorder %s69, %s70
    %p82 = scmp.eq.s32.totalorder %s18, 1
    %p83 = por %p81, %p82
    %p85 = scmp.ne.s32.totalorder %s70, %s84
    %p86 = scmp.eq.s32.totalorder %s18, 0
    %p87 = por %p85, %p86
    %s88 = ssub.s32 %s12, %s19
    %p89 = scmp.eq.s32.totalorder %s88, 0
    %s91 = sadd.s32 %s90, 1
    %s92 = scalar_select %p89, %s90, %s91
    %p95 = pneg %p89
    %p96 = scmp.eq.s32.totalorder %s12, 1
    %p97 = por %p95, %p96
    %p98 = scmp.ne.s32.totalorder %s90, %s93
    %p99 = scmp.eq.s32.totalorder %s12, 0
    %p100 = por %p98, %p99
    %p101 = scmp.ne.s32.totalorder %s90, %s93
    %p102 = scmp.eq.s32.totalorder %s17, 1
    %p103 = por %p101, %p102
    %p104 = scmp.ne.s32.totalorder %s93, %s94
    %p105 = scmp.eq.s32.totalorder %s17, 0
    %p106 = por %p104, %p105
    %p107 = scmp.ne.s32.totalorder %s93, %s94
    %p108 = scmp.eq.s32.totalorder %s18, 1
    %p109 = por %p107, %p108
    %p111 = scmp.ne.s32.totalorder %s94, %s110
    %p112 = scmp.eq.s32.totalorder %s18, 0
    %p113 = por %p111, %p112
    %s114 = ssub.s32 %s12, %s19
    %p115 = scmp.eq.s32.totalorder %s114, 0
    %s117 = sadd.s32 %s116, 1
    %s118 = scalar_select %p115, %s116, %s117
    %p121 = pneg %p115
    %p122 = scmp.eq.s32.totalorder %s12, 1
    %p123 = por %p121, %p122
    %p124 = scmp.ne.s32.totalorder %s116, %s119
    %p125 = scmp.eq.s32.totalorder %s12, 0
    %p126 = por %p124, %p125
    %p127 = scmp.ne.s32.totalorder %s116, %s119
    %p128 = scmp.eq.s32.totalorder %s17, 1
    %p129 = por %p127, %p128
    %p130 = scmp.ne.s32.totalorder %s119, %s120
    %p131 = scmp.eq.s32.totalorder %s17, 0
    %p132 = por %p130, %p131
    %p133 = scmp.ne.s32.totalorder %s119, %s120
    %p134 = scmp.eq.s32.totalorder %s18, 1
    %p135 = por %p133, %p134
    %p137 = scmp.ne.s32.totalorder %s120, %s136
    %p138 = scmp.eq.s32.totalorder %s18, 0
    %p139 = por %p137, %p138
    %s140 = ssub.s32 %s12, %s19
    %p141 = scmp.eq.s32.totalorder %s140, 0
    %s143 = sadd.s32 %s142, 1
    %s144 = scalar_select %p141, %s142, %s143
    %p147 = pneg %p141
    %p148 = scmp.eq.s32.totalorder %s12, 1
    %p149 = por %p147, %p148
    %p150 = scmp.ne.s32.totalorder %s142, %s145
    %p151 = scmp.eq.s32.totalorder %s12, 0
    %p152 = por %p150, %p151
    %p153 = scmp.ne.s32.totalorder %s142, %s145
    %p154 = scmp.eq.s32.totalorder %s17, 1
    %p155 = por %p153, %p154
    %p156 = scmp.ne.s32.totalorder %s145, %s146
    %p157 = scmp.eq.s32.totalorder %s17, 0
    %p158 = por %p156, %p157
    %p159 = scmp.ne.s32.totalorder %s145, %s146
    %p160 = scmp.eq.s32.totalorder %s18, 1
    %p161 = por %p159, %p160
    %p163 = scmp.ne.s32.totalorder %s146, %s162
    %p164 = scmp.eq.s32.totalorder %s18, 0
    %p165 = por %p163, %p164
    %p166 = scmp.le.s32.totalorder 1, %s12
    %p167 = scmp.lt.s32.totalorder %s12, 3
    %p168 = pnand %p166, %p167
    %p169 = pneg %p168
    // Predicated region
    $region9: #{convlstm_cell_forward.1} parent=5 // pred_check
      _
    $region10: #{convlstm_cell_forward.1} parent=5 // pred_check_branch
      %171 = sbr.rel (%p168) target = $region12
    $region11: #{convlstm_cell_forward.1} parent=5 // pred_region
      %s172 = ssub.s32 %s12, 1
      // Predicated region
      $region13: #{convlstm_cell_forward.1} parent=11 // pred_check
        %p173 = pneg %p59
      $region14: #{convlstm_cell_forward.1} parent=11 // pred_check_branch
        %175 = sbr.rel (%p173) target = $region16
      $region15: #{convlstm_cell_forward.1} parent=11 // pred_region
        _
      $region16: #{convlstm_cell_forward.1} parent=11 // pred_fallthru
        _
      // Predicated region
      $region17: #{convlstm_cell_forward.1} parent=11 // pred_check
        %p176 = pneg %p80
      $region18: #{convlstm_cell_forward.1} parent=11 // pred_check_branch
        %178 = sbr.rel (%p176) target = $region20
      $region19: #{convlstm_cell_forward.1} parent=11 // pred_region
        _
      $region20: #{convlstm_cell_forward.1} parent=11 // pred_fallthru
        _
    $region12: #{convlstm_cell_forward.1} parent=5 // pred_fallthru
      _
    %p179 = scmp.lt.s32.totalorder %s12, 2
    // Predicated region
    $region21: #{convlstm_cell_forward.1} parent=5 // pred_check
      %p180 = pneg %p179
    $region22: #{convlstm_cell_forward.1} parent=5 // pred_check_branch
      %182 = sbr.rel (%p180) target = $region24
    $region23: #{convlstm_cell_forward.1} parent=5 // pred_region
      // Predicated region
      $region25: #{convlstm_cell_forward.1} parent=23 // pred_check
        %p183 = pneg %p32
      $region26: #{convlstm_cell_forward.1} parent=23 // pred_check_branch
        %185 = sbr.rel (%p183) target = $region28
      $region27: #{convlstm_cell_forward.1} parent=23 // pred_region
        %p186 = scmp.lt.s32.totalorder %s12, 1
        %s187 = scalar_select %p186, %s12, 1
        %s188 = smul.addr %s187, 6
        %s189 = smul.addr %s188, 4
        %s190 = scalar_lea.vmem %s0, %s189
      $region28: #{convlstm_cell_forward.1} parent=23 // pred_fallthru
        _
      // Predicated region
      $region29: #{convlstm_cell_forward.1} parent=23 // pred_check
        %p191 = pneg %p100
      $region30: #{convlstm_cell_forward.1} parent=23 // pred_check_branch
        %193 = sbr.rel (%p191) target = $region32
      $region31: #{convlstm_cell_forward.1} parent=23 // pred_region
        %p194 = scmp.lt.s32.totalorder %s12, 1
        %s195 = scalar_select %p194, %s12, 1
        %s196 = smul.addr %s195, 3
        %s197 = smul.addr %s196, 8
        %s198 = scalar_lea.vmem %s3, %s197
      $region32: #{convlstm_cell_forward.1} parent=23 // pred_fallthru
        _
    $region24: #{convlstm_cell_forward.1} parent=5 // pred_fallthru
      _
    %p199 = scmp.le.s32.totalorder 1, %s12
    %p200 = scmp.lt.s32.totalorder %s12, 3
    %p201 = pnand %p199, %p200
    %p202 = pneg %p201
    // Predicated region
    $region33: #{convlstm_cell_forward.1} parent=5 // pred_check
      _
    $region34: #{convlstm_cell_forward.1} parent=5 // pred_check_branch
      %204 = sbr.rel (%p201) target = $region36
    $region35: #{convlstm_cell_forward.1} parent=5 // pred_region
      %s205 = ssub.s32 %s12, 1
      %p206 = scmp.lt.s32.totalorder %s17, 1
      %s207 = scalar_select %p206, %s17, 1
      %s208 = smul.addr %s207, 6
      %s209 = smul.addr %s208, 4
      %s210 = scalar_lea.vmem %s0, %s209
      %p211 = pneg %p38
      %p212 = pneg %p35
      %p213 = pneg %p59
      %p214 = pneg %p56
      %p215 = pneg %p80
      %p216 = pneg %p77
      %p217 = scmp.lt.s32.totalorder %s17, 1
      %s218 = scalar_select %p217, %s17, 1
      %s219 = smul.addr %s218, 3
      %s220 = smul.addr %s219, 8
      %s221 = scalar_lea.vmem %s3, %s220
      %p222 = pneg %p106
      %p223 = pneg %p103
      %p224 = pneg %p132
      %p225 = pneg %p129
      %p226 = scmp.lt.s32.totalorder %s17, 1
      %s227 = scalar_select %p226, %s17, 1
      %s228 = smul.addr %s227, 3
      %s229 = smul.addr %s228, 4
      %s230 = scalar_lea.vmem %s4, %s229
      %p231 = pneg %p158
      %p232 = pneg %p155
      %p233 = scmp.lt.s32.totalorder %s17, 1
      %s234 = scalar_select %p233, %s17, 1
      %s235 = smul.addr %s234, 3
      %s236 = smul.addr %s235, 8
      %s237 = scalar_lea.vmem %s5, %s236
      %p238 = scmp.lt.s32.totalorder %s17, 1
      %s239 = scalar_select %p238, %s17, 1
      %s240 = smul.addr %s239, 6
      %s241 = smul.addr %s240, 4
      %s242 = scalar_lea.vmem %s0, %s241
      %p243 = scmp.lt.s32.totalorder %s17, 1
      %s244 = scalar_select %p243, %s17, 1
      %s245 = smul.addr %s244, 3
      %s246 = smul.addr %s245, 8
      %s247 = scalar_lea.vmem %s3, %s246
      %p248 = scmp.lt.s32.totalorder %s17, 1
      %s249 = scalar_select %p248, %s17, 1
      %s250 = smul.addr %s249, 3
      %s251 = smul.addr %s250, 4
      %s252 = scalar_lea.vmem %s4, %s251
      %p253 = scmp.lt.s32.totalorder %s17, 1
      %s254 = scalar_select %p253, %s17, 1
      %s255 = smul.addr %s254, 3
      %s256 = smul.addr %s255, 8
      %s257 = scalar_lea.vmem %s5, %s256
      %v259 = vld [vmem:[%s242] sm:$0xff]
      %v260 = vld [vmem:[%s242 + $0x8] sm:$0xf]
      %v261 = vld [vmem:[%s242 + $0xc] sm:$0xff]
      %v262 = vld [vmem:[%s242 + $0x14] sm:$0xf]
      %v263 = vunpack.c.l.bf16 %v259
      %v264 = vunpack.c.h.bf16 %v259
      %v265 = vunpack.c.l.bf16 %v260
      %v266 = vunpack.c.l.bf16 %v261
      %v267 = vunpack.c.h.bf16 %v261
      %v268 = vunpack.c.l.bf16 %v262
      %269 = vrot.lane.b32.xlu0 %v263, 19
      %v270 = vpop.permute.xlu0 %269
      %271 = vrot.lane.b32.xlu0 %v266, 19
      %v272 = vpop.permute.xlu0 %271
      %273 = vrot.lane.b32.xlu0 %v264, 19
      %v274 = vpop.permute.xlu0 %273
      %275 = vrot.lane.b32.xlu0 %v267, 19
      %v276 = vpop.permute.xlu0 %275
      %277 = vrot.lane.b32.xlu0 %v265, 19
      %v278 = vpop.permute.xlu0 %277
      %279 = vrot.lane.b32.xlu0 %v268, 19
      %v280 = vpop.permute.xlu0 %279
      %v281 = vlaneseq
      %v282 = vand.u32 %v281, 127
      %vm283 = vcmp.lt.s32.totalorder %v282, 19
      %v284 = vsel %vm283, %v274, %v278
      %v285 = vsel %vm283, %v276, %v280
      %v286 = vsel %vm283, %v270, %v274
      %v287 = vsel %vm283, %v272, %v276
      %v288 = vsel %vm283, %v278, %v270
      %v289 = vsel %vm283, %v280, %v272
      %v290 = vpack.c.bf16 %v289, %v288
      %v291 = vpack.c.bf16 %v287, %v286
      %v292 = vpack.c.bf16 %v285, %v284
      %v293 = vld [vmem:[%s1] sm:$0xf]
      %v294 = vld [vmem:[%s1 + $0x4] sm:$0xf]
      %v295 = vld [vmem:[%s1 + $0x8] sm:$0xf]
      %v296 = vld [vmem:[%s1 + $0xc] sm:$0xf]
      %297 = vrot.lane.b32.xlu0 %v263, 18
      %v298 = vpop.permute.xlu0 %297
      %299 = vrot.lane.b32.xlu0 %v266, 18
      %v300 = vpop.permute.xlu0 %299
      %301 = vrot.lane.b32.xlu0 %v264, 18
      %v302 = vpop.permute.xlu0 %301
      %303 = vrot.lane.b32.xlu0 %v267, 18
      %v304 = vpop.permute.xlu0 %303
      %305 = vrot.lane.b32.xlu0 %v265, 18
      %v306 = vpop.permute.xlu0 %305
      %307 = vrot.lane.b32.xlu0 %v268, 18
      %v308 = vpop.permute.xlu0 %307
      %vm309 = vcmp.lt.s32.totalorder %v282, 18
      %v310 = vsel %vm309, %v302, %v306
      %v311 = vsel %vm309, %v304, %v308
      %v312 = vsel %vm309, %v298, %v302
      %v313 = vsel %vm309, %v300, %v304
      %v314 = vsel %vm309, %v306, %v298
      %v315 = vsel %vm309, %v308, %v300
      %v316 = vpack.c.bf16 %v315, %v314
      %v317 = vpack.c.bf16 %v313, %v312
      %v318 = vpack.c.bf16 %v311, %v310
      %s319 = scalar_lea.vmem %s1, 16
      %v320 = vld [vmem:[%s319] sm:$0xf]
      %v321 = vld [vmem:[%s319 + $0x4] sm:$0xf]
      %v322 = vld [vmem:[%s319 + $0x8] sm:$0xf]
      %v323 = vld [vmem:[%s319 + $0xc] sm:$0xf]
      %v328 = vunpack.c.l.b16 %v320
      %v329 = vunpack.c.l.b16 %v321
      %v330 = vunpack.c.l.b16 %v322
      %v331 = vunpack.c.l.b16 %v323
      %v332 = vpack.c.b16 %v329, %v328
      %v333 = vpack.c.b16 %v331, %v330
      %vm334 = vcmask 130048
      %v336 = vsel %vm334, %v332, 0
      %v339 = vsel %vm334, %v333, 0
      %341 = vmatprep.subr.bf16.mxu0 %v317
      %342 = vmatpush1.bf16.msra.mxu0 %v316
      %343 = vmatprep.subr.bf16.mxu0 0
      %344 = vmatpush1.bf16.msra.mxu0 0
      %345 = vmatprep.subr.bf16.mxu0 0
      %346 = vmatpush1.bf16.msra.mxu0 0
      %347 = vmatprep.subr.bf16.mxu0 0
      %348 = vmatpush1.bf16.msra.mxu0 0
      %349 = vmatprep.subr.bf16.mxu0 0
      %350 = vmatpush1.bf16.msra.mxu0 0
      %351 = vmatprep.subr.bf16.mxu0 0
      %352 = vmatpush1.bf16.msra.mxu0 0
      %353 = vmatprep.subr.bf16.mxu0 0
      %354 = vmatpush1.bf16.msra.mxu0 0
      %355 = vmatprep.subr.bf16.mxu0 0
      %356 = vmatpush1.bf16.msra.mxu0 0
      %357 = vmatprep.subr.bf16.mxu0 0
      %358 = vmatpush1.bf16.msra.mxu0 0
      %359 = vmatprep.subr.bf16.mxu0 0
      %360 = vmatpush1.bf16.msra.mxu0 0
      %361 = vmatprep.subr.bf16.mxu0 0
      %362 = vmatpush1.bf16.msra.mxu0 0
      %363 = vmatprep.subr.bf16.mxu0 0
      %364 = vmatpush1.bf16.msra.mxu0 0
      %365 = vmatprep.subr.bf16.mxu0 0
      %366 = vmatpush1.bf16.msra.mxu0 0
      %367 = vmatprep.subr.bf16.mxu0 0
      %368 = vmatpush1.bf16.msra.mxu0 0
      %369 = vmatprep.subr.bf16.mxu0 0
      %370 = vmatpush1.bf16.msra.mxu0 0
      %371 = vmatprep.subr.bf16.mxu0 0
      %372 = vmatpush1.bf16.msra.mxu0 0
      %373 = vmatprep.mubr.bf16.mxu0 0
      %374 = vmatmul.mubr.bf16.gmra.mrb[0].mxu0 %v336
      %v375 = vpop.f32.mrb[0].mxu0
      %v376 = vadd.f32 0.0, %v375
      %v377 = vpop.f32.mrb[0].mxu0
      %v378 = vadd.f32 0.0, %v377
      %v379 = vpop.f32.mrb[0].mxu0
      %v380 = vadd.f32 0.0, %v379
      %v381 = vpop.f32.mrb[0].mxu0
      %v382 = vadd.f32 0.0, %v381
      %383 = vmatprep.mubr.bf16.mxu0 0
      %384 = vmatmul.mubr.bf16.gmra.mrb[0].mxu0 %v339
      %v385 = vpop.f32.mrb[0].mxu0
      %v386 = vadd.f32 0.0, %v385
      %v387 = vpop.f32.mrb[0].mxu0
      %v388 = vadd.f32 0.0, %v387
      %v389 = vpop.f32.mrb[0].mxu0
      %v390 = vadd.f32 0.0, %v389
      %v391 = vpop.f32.mrb[0].mxu0
      %v392 = vadd.f32 0.0, %v391
      %393 = vdwg.mxu0
      %394 = vmatprep.subr.bf16.mxu0 0
      %395 = vmatpush1.bf16.msra.mxu0 %v318
      %396 = vmatprep.subr.bf16.mxu0 0
      %397 = vmatpush1.bf16.msra.mxu0 0
      %398 = vmatprep.subr.bf16.mxu0 0
      %399 = vmatpush1.bf16.msra.mxu0 0
      %400 = vmatprep.subr.bf16.mxu0 0
      %401 = vmatpush1.bf16.msra.mxu0 0
      %402 = vmatprep.subr.bf16.mxu0 0
      %403 = vmatpush1.bf16.msra.mxu0 0
      %404 = vmatprep.subr.bf16.mxu0 0
      %405 = vmatpush1.bf16.msra.mxu0 0
      %406 = vmatprep.subr.bf16.mxu0 0
      %407 = vmatpush1.bf16.msra.mxu0 0
      %408 = vmatprep.subr.bf16.mxu0 0
      %409 = vmatpush1.bf16.msra.mxu0 0
      %410 = vmatprep.subr.bf16.mxu0 0
      %411 = vmatpush1.bf16.msra.mxu0 0
      %412 = vmatprep.subr.bf16.mxu0 0
      %413 = vmatpush1.bf16.msra.mxu0 0
      %414 = vmatprep.subr.bf16.mxu0 0
      %415 = vmatpush1.bf16.msra.mxu0 0
      %416 = vmatprep.subr.bf16.mxu0 0
      %417 = vmatpush1.bf16.msra.mxu0 0
      %418 = vmatprep.subr.bf16.mxu0 0
      %419 = vmatpush1.bf16.msra.mxu0 0
      %420 = vmatprep.subr.bf16.mxu0 0
      %421 = vmatpush1.bf16.msra.mxu0 0
      %422 = vmatprep.subr.bf16.mxu0 0
      %423 = vmatpush1.bf16.msra.mxu0 0
      %424 = vmatprep.subr.bf16.mxu0 0
      %425 = vmatpush1.bf16.msra.mxu0 0
      %426 = vmatprep.mubr.bf16.mxu0 0
      %427 = vmatmul.mubr.bf16.gmra.mrb[0].mxu0 %v336
      %v428 = vpop.f32.mrb[0].mxu0
      %v429 = vadd.f32 0.0, %v428
      %v430 = vpop.f32.mrb[0].mxu0
      %v431 = vpop.f32.mrb[0].mxu0
      %v432 = vadd.f32 0.0, %v431
      %v433 = vpop.f32.mrb[0].mxu0
      %434 = vmatprep.mubr.bf16.mxu0 0
      %435 = vmatmul.mubr.bf16.gmra.mrb[0].mxu0 %v339
      %v436 = vpop.f32.mrb[0].mxu0
      %v437 = vadd.f32 0.0, %v436
      %v438 = vpop.f32.mrb[0].mxu0
      %v439 = vpop.f32.mrb[0].mxu0
      %v440 = vadd.f32 0.0, %v439
      %v441 = vpop.f32.mrb[0].mxu0
      %442 = vdwg.mxu0
      %v447 = vunpack.c.l.b16 %v293
      %v448 = vunpack.c.l.b16 %v294
      %v449 = vunpack.c.l.b16 %v295
      %v450 = vunpack.c.l.b16 %v296
      %v451 = vpack.c.b16 %v448, %v447
      %v452 = vpack.c.b16 %v450, %v449
      %v454 = vsel %vm334, %v451, 0
      %v457 = vsel %vm334, %v452, 0
      %459 = vmatprep.subr.bf16.mxu0 %v291
      %460 = vmatpush1.bf16.msra.mxu0 %v290
      %461 = vmatprep.subr.bf16.mxu0 0
      %462 = vmatpush1.bf16.msra.mxu0 0
      %463 = vmatprep.subr.bf16.mxu0 0
      %464 = vmatpush1.bf16.msra.mxu0 0
      %465 = vmatprep.subr.bf16.mxu0 0
      %466 = vmatpush1.bf16.msra.mxu0 0
      %467 = vmatprep.subr.bf16.mxu0 0
      %468 = vmatpush1.bf16.msra.mxu0 0
      %469 = vmatprep.subr.bf16.mxu0 0
      %470 = vmatpush1.bf16.msra.mxu0 0
      %471 = vmatprep.subr.bf16.mxu0 0
      %472 = vmatpush1.bf16.msra.mxu0 0
      %473 = vmatprep.subr.bf16.mxu0 0
      %474 = vmatpush1.bf16.msra.mxu0 0
      %475 = vmatprep.subr.bf16.mxu0 0
      %476 = vmatpush1.bf16.msra.mxu0 0
      %477 = vmatprep.subr.bf16.mxu0 0
      %478 = vmatpush1.bf16.msra.mxu0 0
      %479 = vmatprep.subr.bf16.mxu0 0
      %480 = vmatpush1.bf16.msra.mxu0 0
      %481 = vmatprep.subr.bf16.mxu0 0
      %482 = vmatpush1.bf16.msra.mxu0 0
      %483 = vmatprep.subr.bf16.mxu0 0
      %484 = vmatpush1.bf16.msra.mxu0 0
      %485 = vmatprep.subr.bf16.mxu0 0
      %486 = vmatpush1.bf16.msra.mxu0 0
      %487 = vmatprep.subr.bf16.mxu0 0
      %488 = vmatpush1.bf16.msra.mxu0 0
      %489 = vmatprep.subr.bf16.mxu0 0
      %490 = vmatpush1.bf16.msra.mxu0 0
      %491 = vmatprep.mubr.bf16.mxu0 0
      %492 = vmatmul.mubr.bf16.gmra.mrb[0].mxu0 %v454
      %v493 = vpop.f32.mrb[0].mxu0
      %v494 = vadd.f32 %v376, %v493
      %v495 = vpop.f32.mrb[0].mxu0
      %v496 = vadd.f32 %v378, %v495
      %v497 = vpop.f32.mrb[0].mxu0
      %v498 = vadd.f32 %v380, %v497
      %v499 = vpop.f32.mrb[0].mxu0
      %v500 = vadd.f32 %v382, %v499
      %501 = vmatprep.mubr.bf16.mxu0 0
      %502 = vmatmul.mubr.bf16.gmra.mrb[0].mxu0 %v457
      %v503 = vpop.f32.mrb[0].mxu0
      %v504 = vadd.f32 %v386, %v503
      %v505 = vpop.f32.mrb[0].mxu0
      %v506 = vadd.f32 %v388, %v505
      %v507 = vpop.f32.mrb[0].mxu0
      %v508 = vadd.f32 %v390, %v507
      %v509 = vpop.f32.mrb[0].mxu0
      %v510 = vadd.f32 %v392, %v509
      %511 = vdwg.mxu0
      %512 = vmatprep.subr.bf16.mxu0 0
      %513 = vmatpush1.bf16.msra.mxu0 %v292
      %514 = vmatprep.subr.bf16.mxu0 0
      %515 = vmatpush1.bf16.msra.mxu0 0
      %516 = vmatprep.subr.bf16.mxu0 0
      %517 = vmatpush1.bf16.msra.mxu0 0
      %518 = vmatprep.subr.bf16.mxu0 0
      %519 = vmatpush1.bf16.msra.mxu0 0
      %520 = vmatprep.subr.bf16.mxu0 0
      %521 = vmatpush1.bf16.msra.mxu0 0
      %522 = vmatprep.subr.bf16.mxu0 0
      %523 = vmatpush1.bf16.msra.mxu0 0
      %524 = vmatprep.subr.bf16.mxu0 0
      %525 = vmatpush1.bf16.msra.mxu0 0
      %526 = vmatprep.subr.bf16.mxu0 0
      %527 = vmatpush1.bf16.msra.mxu0 0
      %528 = vmatprep.subr.bf16.mxu0 0
      %529 = vmatpush1.bf16.msra.mxu0 0
      %530 = vmatprep.subr.bf16.mxu0 0
      %531 = vmatpush1.bf16.msra.mxu0 0
      %532 = vmatprep.subr.bf16.mxu0 0
      %533 = vmatpush1.bf16.msra.mxu0 0
      %534 = vmatprep.subr.bf16.mxu0 0
      %535 = vmatpush1.bf16.msra.mxu0 0
      %536 = vmatprep.subr.bf16.mxu0 0
      %537 = vmatpush1.bf16.msra.mxu0 0
      %538 = vmatprep.subr.bf16.mxu0 0
      %539 = vmatpush1.bf16.msra.mxu0 0
      %540 = vmatprep.subr.bf16.mxu0 0
      %541 = vmatpush1.bf16.msra.mxu0 0
      %542 = vmatprep.subr.bf16.mxu0 0
      %543 = vmatpush1.bf16.msra.mxu0 0
      %544 = vmatprep.mubr.bf16.mxu0 0
      %545 = vmatmul.mubr.bf16.gmra.mrb[0].mxu0 %v454
      %v546 = vpop.f32.mrb[0].mxu0
      %v547 = vadd.f32 %v429, %v546
      %v548 = vpop.f32.mrb[0].mxu0
      %v549 = vpop.f32.mrb[0].mxu0
      %v550 = vadd.f32 %v432, %v549
      %v551 = vpop.f32.mrb[0].mxu0
      %552 = vmatprep.mubr.bf16.mxu0 0
      %553 = vmatmul.mubr.bf16.gmra.mrb[0].mxu0 %v457
      %v554 = vpop.f32.mrb[0].mxu0
      %v555 = vadd.f32 %v437, %v554
      %v556 = vpop.f32.mrb[0].mxu0
      %v557 = vpop.f32.mrb[0].mxu0
      %v558 = vadd.f32 %v440, %v557
      %v559 = vpop.f32.mrb[0].mxu0
      %560 = vdwg.mxu0
      %561 = vrot.lane.b32.xlu0 %v263, 17
      %v562 = vpop.permute.xlu0 %561
      %563 = vrot.lane.b32.xlu0 %v266, 17
      %v564 = vpop.permute.xlu0 %563
      %565 = vrot.lane.b32.xlu0 %v264, 17
      %v566 = vpop.permute.xlu0 %565
      %567 = vrot.lane.b32.xlu0 %v267, 17
      %v568 = vpop.permute.xlu0 %567
      %569 = vrot.lane.b32.xlu0 %v265, 17
      %v570 = vpop.permute.xlu0 %569
      %571 = vrot.lane.b32.xlu0 %v268, 17
      %v572 = vpop.permute.xlu0 %571
      %vm573 = vcmp.lt.s32.totalorder %v282, 17
      %v574 = vsel %vm573, %v566, %v570
      %v575 = vsel %vm573, %v568, %v572
      %v576 = vsel %vm573, %v562, %v566
      %v577 = vsel %vm573, %v564, %v568
      %v578 = vsel %vm573, %v570, %v562
      %v579 = vsel %vm573, %v572, %v564
      %v580 = vpack.c.bf16 %v579, %v578
      %v581 = vpack.c.bf16 %v577, %v576
      %v582 = vpack.c.bf16 %v575, %v574
      %s583 = scalar_lea.vmem %s1, 32
      %v584 = vld [vmem:[%s583] sm:$0xf]
      %v585 = vld [vmem:[%s583 + $0x4] sm:$0xf]
      %v586 = vld [vmem:[%s583 + $0x8] sm:$0xf]
      %v587 = vld [vmem:[%s583 + $0xc] sm:$0xf]
      %v592 = vunpack.c.l.b16 %v584
      %v593 = vunpack.c.l.b16 %v585
      %v594 = vunpack.c.l.b16 %v586
      %v595 = vunpack.c.l.b16 %v587
      %v596 = vpack.c.b16 %v593, %v592
      %v597 = vpack.c.b16 %v595, %v594
      %v599 = vsel %vm334, %v596, 0
      %v602 = vsel %vm334, %v597, 0
      %604 = vmatprep.subr.bf16.mxu0 %v581
      %605 = vmatpush1.bf16.msra.mxu0 %v580
      %606 = vmatprep.subr.bf16.mxu0 0
      %607 = vmatpush1.bf16.msra.mxu0 0
      %608 = vmatprep.subr.bf16.mxu0 0
      %609 = vmatpush1.bf16.msra.mxu0 0
      %610 = vmatprep.subr.bf16.mxu0 0
      %611 = vmatpush1.bf16.msra.mxu0 0
      %612 = vmatprep.subr.bf16.mxu0 0
      %613 = vmatpush1.bf16.msra.mxu0 0
      %614 = vmatprep.subr.bf16.mxu0 0
      %615 = vmatpush1.bf16.msra.mxu0 0
      %616 = vmatprep.subr.bf16.mxu0 0
      %617 = vmatpush1.bf16.msra.mxu0 0
      %618 = vmatprep.subr.bf16.mxu0 0
      %619 = vmatpush1.bf16.msra.mxu0 0
      %620 = vmatprep.subr.bf16.mxu0 0
      %621 = vmatpush1.bf16.msra.mxu0 0
      %622 = vmatprep.subr.bf16.mxu0 0
      %623 = vmatpush1.bf16.msra.mxu0 0
      %624 = vmatprep.subr.bf16.mxu0 0
      %625 = vmatpush1.bf16.msra.mxu0 0
      %626 = vmatprep.subr.bf16.mxu0 0
      %627 = vmatpush1.bf16.msra.mxu0 0
      %628 = vmatprep.subr.bf16.mxu0 0
      %629 = vmatpush1.bf16.msra.mxu0 0
      %630 = vmatprep.subr.bf16.mxu0 0
      %631 = vmatpush1.bf16.msra.mxu0 0
      %632 = vmatprep.subr.bf16.mxu0 0
      %633 = vmatpush1.bf16.msra.mxu0 0
      %634 = vmatprep.subr.bf16.mxu0 0
      %635 = vmatpush1.bf16.msra.mxu0 0
      %636 = vmatprep.mubr.bf16.mxu0 0
      %637 = vmatmul.mubr.bf16.gmra.mrb[0].mxu0 %v599
      %v638 = vpop.f32.mrb[0].mxu0
      %v639 = vadd.f32 0.0, %v638
      %v640 = vpop.f32.mrb[0].mxu0
      %v641 = vadd.f32 0.0, %v640
      %v642 = vpop.f32.mrb[0].mxu0
      %v643 = vadd.f32 0.0, %v642
      %v644 = vpop.f32.mrb[0].mxu0
      %v645 = vadd.f32 0.0, %v644
      %646 = vmatprep.mubr.bf16.mxu0 0
      %647 = vmatmul.mubr.bf16.gmra.mrb[0].mxu0 %v602
      %v648 = vpop.f32.mrb[0].mxu0
      %v649 = vadd.f32 0.0, %v648
      %v650 = vpop.f32.mrb[0].mxu0
      %v651 = vadd.f32 0.0, %v650
      %v652 = vpop.f32.mrb[0].mxu0
      %v653 = vadd.f32 0.0, %v652
      %v654 = vpop.f32.mrb[0].mxu0
      %v655 = vadd.f32 0.0, %v654
      %656 = vdwg.mxu0
      %657 = vmatprep.subr.bf16.mxu0 0
      %658 = vmatpush1.bf16.msra.mxu0 %v582
      %659 = vmatprep.subr.bf16.mxu0 0
      %660 = vmatpush1.bf16.msra.mxu0 0
      %661 = vmatprep.subr.bf16.mxu0 0
      %662 = vmatpush1.bf16.msra.mxu0 0
      %663 = vmatprep.subr.bf16.mxu0 0
      %664 = vmatpush1.bf16.msra.mxu0 0
      %665 = vmatprep.subr.bf16.mxu0 0
      %666 = vmatpush1.bf16.msra.mxu0 0
      %667 = vmatprep.subr.bf16.mxu0 0
      %668 = vmatpush1.bf16.msra.mxu0 0
      %669 = vmatprep.subr.bf16.mxu0 0
      %670 = vmatpush1.bf16.msra.mxu0 0
      %671 = vmatprep.subr.bf16.mxu0 0
      %672 = vmatpush1.bf16.msra.mxu0 0
      %673 = vmatprep.subr.bf16.mxu0 0
      %674 = vmatpush1.bf16.msra.mxu0 0
      %675 = vmatprep.subr.bf16.mxu0 0
      %676 = vmatpush1.bf16.msra.mxu0 0
      %677 = vmatprep.subr.bf16.mxu0 0
      %678 = vmatpush1.bf16.msra.mxu0 0
      %679 = vmatprep.subr.bf16.mxu0 0
      %680 = vmatpush1.bf16.msra.mxu0 0
      %681 = vmatprep.subr.bf16.mxu0 0
      %682 = vmatpush1.bf16.msra.mxu0 0
      %683 = vmatprep.subr.bf16.mxu0 0
      %684 = vmatpush1.bf16.msra.mxu0 0
      %685 = vmatprep.subr.bf16.mxu0 0
      %686 = vmatpush1.bf16.msra.mxu0 0
      %687 = vmatprep.subr.bf16.mxu0 0
      %688 = vmatpush1.bf16.msra.mxu0 0
      %689 = vmatprep.mubr.bf16.mxu0 0
      %690 = vmatmul.mubr.bf16.gmra.mrb[0].mxu0 %v599
      %v691 = vpop.f32.mrb[0].mxu0
      %v692 = vadd.f32 0.0, %v691
      %v693 = vpop.f32.mrb[0].mxu0
      %v694 = vpop.f32.mrb[0].mxu0
      %v695 = vadd.f32 0.0, %v694
      %v696 = vpop.f32.mrb[0].mxu0
      %697 = vmatprep.mubr.bf16.mxu0 0
      %698 = vmatmul.mubr.bf16.gmra.mrb[0].mxu0 %v602
      %v699 = vpop.f32.mrb[0].mxu0
      %v700 = vadd.f32 0.0, %v699
      %v701 = vpop.f32.mrb[0].mxu0
      %v702 = vpop.f32.mrb[0].mxu0
      %v703 = vadd.f32 0.0, %v702
      %v704 = vpop.f32.mrb[0].mxu0
      %705 = vdwg.mxu0
      %v706 = vadd.f32 %v494, %v639
      %v707 = vadd.f32 %v496, %v641
      %v708 = vadd.f32 %v547, %v692
      %v709 = vadd.f32 %v498, %v643
      %v710 = vadd.f32 %v500, %v645
      %v711 = vadd.f32 %v550, %v695
      %v712 = vadd.f32 %v504, %v649
      %v713 = vadd.f32 %v506, %v651
      %v714 = vadd.f32 %v555, %v700
      %v715 = vadd.f32 %v508, %v653
      %v716 = vadd.f32 %v510, %v655
      %v717 = vadd.f32 %v558, %v703
      %718 = vrot.lane.b32.xlu0 %v263, 1
      %v719 = vpop.permute.xlu0 %718
      %720 = vrot.lane.b32.xlu0 %v266, 1
      %v721 = vpop.permute.xlu0 %720
      %722 = vrot.lane.b32.xlu0 %v264, 1
      %v723 = vpop.permute.xlu0 %722
      %724 = vrot.lane.b32.xlu0 %v267, 1
      %v725 = vpop.permute.xlu0 %724
      %726 = vrot.lane.b32.xlu0 %v265, 1
      %v727 = vpop.permute.xlu0 %726
      %728 = vrot.lane.b32.xlu0 %v268, 1
      %v729 = vpop.permute.xlu0 %728
      %vm730 = vcmp.lt.s32.totalorder %v282, 1
      %v731 = vsel %vm730, %v723, %v727
      %v732 = vsel %vm730, %v725, %v729
      %v733 = vsel %vm730, %v719, %v723
      %v734 = vsel %vm730, %v721, %v725
      %v735 = vsel %vm730, %v727, %v719
      %v736 = vsel %vm730, %v729, %v721
      %v737 = vpack.c.bf16 %v736, %v735
      %v738 = vpack.c.bf16 %v734, %v733
      %v739 = vpack.c.bf16 %v732, %v731
      %s740 = scalar_lea.vmem %s1, 48
      %v741 = vld [vmem:[%s740] sm:$0xf]
      %v742 = vld [vmem:[%s740 + $0x4] sm:$0xf]
      %v743 = vld [vmem:[%s740 + $0x8] sm:$0xf]
      %v744 = vld [vmem:[%s740 + $0xc] sm:$0xf]
      %v749 = vunpack.c.l.b16 %v741
      %v750 = vunpack.c.l.b16 %v742
      %v751 = vunpack.c.l.b16 %v743
      %v752 = vunpack.c.l.b16 %v744
      %v753 = vpack.c.b16 %v750, %v749
      %v754 = vpack.c.b16 %v752, %v751
      %v756 = vsel %vm334, %v753, 0
      %v759 = vsel %vm334, %v754, 0
      %761 = vmatprep.subr.bf16.mxu0 %v738
      %762 = vmatpush1.bf16.msra.mxu0 %v737
      %763 = vmatprep.subr.bf16.mxu0 0
      %764 = vmatpush1.bf16.msra.mxu0 0
      %765 = vmatprep.subr.bf16.mxu0 0
      %766 = vmatpush1.bf16.msra.mxu0 0
      %767 = vmatprep.subr.bf16.mxu0 0
      %768 = vmatpush1.bf16.msra.mxu0 0
      %769 = vmatprep.subr.bf16.mxu0 0
      %770 = vmatpush1.bf16.msra.mxu0 0
      %771 = vmatprep.subr.bf16.mxu0 0
      %772 = vmatpush1.bf16.msra.mxu0 0
      %773 = vmatprep.subr.bf16.mxu0 0
      %774 = vmatpush1.bf16.msra.mxu0 0
      %775 = vmatprep.subr.bf16.mxu0 0
      %776 = vmatpush1.bf16.msra.mxu0 0
      %777 = vmatprep.subr.bf16.mxu0 0
      %778 = vmatpush1.bf16.msra.mxu0 0
      %779 = vmatprep.subr.bf16.mxu0 0
      %780 = vmatpush1.bf16.msra.mxu0 0
      %781 = vmatprep.subr.bf16.mxu0 0
      %782 = vmatpush1.bf16.msra.mxu0 0
      %783 = vmatprep.subr.bf16.mxu0 0
      %784 = vmatpush1.bf16.msra.mxu0 0
      %785 = vmatprep.subr.bf16.mxu0 0
      %786 = vmatpush1.bf16.msra.mxu0 0
      %787 = vmatprep.subr.bf16.mxu0 0
      %788 = vmatpush1.bf16.msra.mxu0 0
      %789 = vmatprep.subr.bf16.mxu0 0
      %790 = vmatpush1.bf16.msra.mxu0 0
      %791 = vmatprep.subr.bf16.mxu0 0
      %792 = vmatpush1.bf16.msra.mxu0 0
      %793 = vmatprep.mubr.bf16.mxu0 0
      %794 = vmatmul.mubr.bf16.gmra.mrb[0].mxu0 %v756
      %v795 = vpop.f32.mrb[0].mxu0
      %v796 = vadd.f32 0.0, %v795
      %v797 = vpop.f32.mrb[0].mxu0
      %v798 = vadd.f32 0.0, %v797
      %v799 = vpop.f32.mrb[0].mxu0
      %v800 = vadd.f32 0.0, %v799
      %v801 = vpop.f32.mrb[0].mxu0
      %v802 = vadd.f32 0.0, %v801
      %803 = vmatprep.mubr.bf16.mxu0 0
      %804 = vmatmul.mubr.bf16.gmra.mrb[0].mxu0 %v759
      %v805 = vpop.f32.mrb[0].mxu0
      %v806 = vadd.f32 0.0, %v805
      %v807 = vpop.f32.mrb[0].mxu0
      %v808 = vadd.f32 0.0, %v807
      %v809 = vpop.f32.mrb[0].mxu0
      %v810 = vadd.f32 0.0, %v809
      %v811 = vpop.f32.mrb[0].mxu0
      %v812 = vadd.f32 0.0, %v811
      %813 = vdwg.mxu0
      %814 = vmatprep.subr.bf16.mxu0 0
      %815 = vmatpush1.bf16.msra.mxu0 %v739
      %816 = vmatprep.subr.bf16.mxu0 0
      %817 = vmatpush1.bf16.msra.mxu0 0
      %818 = vmatprep.subr.bf16.mxu0 0
      %819 = vmatpush1.bf16.msra.mxu0 0
      %820 = vmatprep.subr.bf16.mxu0 0
      %821 = vmatpush1.bf16.msra.mxu0 0
      %822 = vmatprep.subr.bf16.mxu0 0
      %823 = vmatpush1.bf16.msra.mxu0 0
      %824 = vmatprep.subr.bf16.mxu0 0
      %825 = vmatpush1.bf16.msra.mxu0 0
      %826 = vmatprep.subr.bf16.mxu0 0
      %827 = vmatpush1.bf16.msra.mxu0 0
      %828 = vmatprep.subr.bf16.mxu0 0
      %829 = vmatpush1.bf16.msra.mxu0 0
      %830 = vmatprep.subr.bf16.mxu0 0
      %831 = vmatpush1.bf16.msra.mxu0 0
      %832 = vmatprep.subr.bf16.mxu0 0
      %833 = vmatpush1.bf16.msra.mxu0 0
      %834 = vmatprep.subr.bf16.mxu0 0
      %835 = vmatpush1.bf16.msra.mxu0 0
      %836 = vmatprep.subr.bf16.mxu0 0
      %837 = vmatpush1.bf16.msra.mxu0 0
      %838 = vmatprep.subr.bf16.mxu0 0
      %839 = vmatpush1.bf16.msra.mxu0 0
      %840 = vmatprep.subr.bf16.mxu0 0
      %841 = vmatpush1.bf16.msra.mxu0 0
      %842 = vmatprep.subr.bf16.mxu0 0
      %843 = vmatpush1.bf16.msra.mxu0 0
      %844 = vmatprep.subr.bf16.mxu0 0
      %845 = vmatpush1.bf16.msra.mxu0 0
      %846 = vmatprep.mubr.bf16.mxu0 0
      %847 = vmatmul.mubr.bf16.gmra.mrb[0].mxu0 %v756
      %v848 = vpop.f32.mrb[0].mxu0
      %v849 = vadd.f32 0.0, %v848
      %v850 = vpop.f32.mrb[0].mxu0
      %v851 = vpop.f32.mrb[0].mxu0
      %v852 = vadd.f32 0.0, %v851
      %v853 = vpop.f32.mrb[0].mxu0
      %854 = vmatprep.mubr.bf16.mxu0 0
      %855 = vmatmul.mubr.bf16.gmra.mrb[0].mxu0 %v759
      %v856 = vpop.f32.mrb[0].mxu0
      %v857 = vadd.f32 0.0, %v856
      %v858 = vpop.f32.mrb[0].mxu0
      %v859 = vpop.f32.mrb[0].mxu0
      %v860 = vadd.f32 0.0, %v859
      %v861 = vpop.f32.mrb[0].mxu0
      %862 = vdwg.mxu0
      %v863 = vadd.f32 %v706, %v796
      %v864 = vadd.f32 %v707, %v798
      %v865 = vadd.f32 %v708, %v849
      %v866 = vadd.f32 %v709, %v800
      %v867 = vadd.f32 %v710, %v802
      %v868 = vadd.f32 %v711, %v852
      %v869 = vadd.f32 %v712, %v806
      %v870 = vadd.f32 %v713, %v808
      %v871 = vadd.f32 %v714, %v857
      %v872 = vadd.f32 %v715, %v810
      %v873 = vadd.f32 %v716, %v812
      %v874 = vadd.f32 %v717, %v860
      %s875 = scalar_lea.vmem %s1, 64
      %v876 = vld [vmem:[%s875] sm:$0xf]
      %v877 = vld [vmem:[%s875 + $0x4] sm:$0xf]
      %v878 = vld [vmem:[%s875 + $0x8] sm:$0xf]
      %v879 = vld [vmem:[%s875 + $0xc] sm:$0xf]
      %v884 = vunpack.c.l.b16 %v876
      %v885 = vunpack.c.l.b16 %v877
      %v886 = vunpack.c.l.b16 %v878
      %v887 = vunpack.c.l.b16 %v879
      %v888 = vpack.c.b16 %v885, %v884
      %v889 = vpack.c.b16 %v887, %v886
      %v894 = vunpack.c.l.b16 %v259
      %v895 = vunpack.c.h.b16 %v259
      %v896 = vunpack.c.l.b16 %v260
      %v897 = vunpack.c.l.b16 %v261
      %v898 = vunpack.c.h.b16 %v261
      %v899 = vunpack.c.l.b16 %v262
      %v900 = vpack.c.b16 %v897, %v894
      %v901 = vpack.c.b16 %v898, %v895
      %v902 = vpack.c.b16 %v899, %v896
      %v907 = vsel %vm334, %v888, 0
      %v910 = vsel %vm334, %v889, 0
      %912 = vmatprep.subr.bf16.mxu0 %v901
      %913 = vmatpush1.bf16.msra.mxu0 %v900
      %914 = vmatprep.subr.bf16.mxu0 0
      %915 = vmatpush1.bf16.msra.mxu0 0
      %916 = vmatprep.subr.bf16.mxu0 0
      %917 = vmatpush1.bf16.msra.mxu0 0
      %918 = vmatprep.subr.bf16.mxu0 0
      %919 = vmatpush1.bf16.msra.mxu0 0
      %920 = vmatprep.subr.bf16.mxu0 0
      %921 = vmatpush1.bf16.msra.mxu0 0
      %922 = vmatprep.subr.bf16.mxu0 0
      %923 = vmatpush1.bf16.msra.mxu0 0
      %924 = vmatprep.subr.bf16.mxu0 0
      %925 = vmatpush1.bf16.msra.mxu0 0
      %926 = vmatprep.subr.bf16.mxu0 0
      %927 = vmatpush1.bf16.msra.mxu0 0
      %928 = vmatprep.subr.bf16.mxu0 0
      %929 = vmatpush1.bf16.msra.mxu0 0
      %930 = vmatprep.subr.bf16.mxu0 0
      %931 = vmatpush1.bf16.msra.mxu0 0
      %932 = vmatprep.subr.bf16.mxu0 0
      %933 = vmatpush1.bf16.msra.mxu0 0
      %934 = vmatprep.subr.bf16.mxu0 0
      %935 = vmatpush1.bf16.msra.mxu0 0
      %936 = vmatprep.subr.bf16.mxu0 0
      %937 = vmatpush1.bf16.msra.mxu0 0
      %938 = vmatprep.subr.bf16.mxu0 0
      %939 = vmatpush1.bf16.msra.mxu0 0
      %940 = vmatprep.subr.bf16.mxu0 0
      %941 = vmatpush1.bf16.msra.mxu0 0
      %942 = vmatprep.subr.bf16.mxu0 0
      %943 = vmatpush1.bf16.msra.mxu0 0
      %944 = vmatprep.mubr.bf16.mxu0 0
      %945 = vmatmul.mubr.bf16.gmra.mrb[0].mxu0 %v907
      %v946 = vpop.f32.mrb[0].mxu0
      %v947 = vadd.f32 0.0, %v946
      %v948 = vpop.f32.mrb[0].mxu0
      %v949 = vadd.f32 0.0, %v948
      %v950 = vpop.f32.mrb[0].mxu0
      %v951 = vadd.f32 0.0, %v950
      %v952 = vpop.f32.mrb[0].mxu0
      %v953 = vadd.f32 0.0, %v952
      %954 = vmatprep.mubr.bf16.mxu0 0
      %955 = vmatmul.mubr.bf16.gmra.mrb[0].mxu0 %v910
      %v956 = vpop.f32.mrb[0].mxu0
      %v957 = vadd.f32 0.0, %v956
      %v958 = vpop.f32.mrb[0].mxu0
      %v959 = vadd.f32 0.0, %v958
      %v960 = vpop.f32.mrb[0].mxu0
      %v961 = vadd.f32 0.0, %v960
      %v962 = vpop.f32.mrb[0].mxu0
      %v963 = vadd.f32 0.0, %v962
      %964 = vdwg.mxu0
      %965 = vmatprep.subr.bf16.mxu0 0
      %966 = vmatpush1.bf16.msra.mxu0 %v902
      %967 = vmatprep.subr.bf16.mxu0 0
      %968 = vmatpush1.bf16.msra.mxu0 0
      %969 = vmatprep.subr.bf16.mxu0 0
      %970 = vmatpush1.bf16.msra.mxu0 0
      %971 = vmatprep.subr.bf16.mxu0 0
      %972 = vmatpush1.bf16.msra.mxu0 0
      %973 = vmatprep.subr.bf16.mxu0 0
      %974 = vmatpush1.bf16.msra.mxu0 0
      %975 = vmatprep.subr.bf16.mxu0 0
      %976 = vmatpush1.bf16.msra.mxu0 0
      %977 = vmatprep.subr.bf16.mxu0 0
      %978 = vmatpush1.bf16.msra.mxu0 0
      %979 = vmatprep.subr.bf16.mxu0 0
      %980 = vmatpush1.bf16.msra.mxu0 0
      %981 = vmatprep.subr.bf16.mxu0 0
      %982 = vmatpush1.bf16.msra.mxu0 0
      %983 = vmatprep.subr.bf16.mxu0 0
      %984 = vmatpush1.bf16.msra.mxu0 0
      %985 = vmatprep.subr.bf16.mxu0 0
      %986 = vmatpush1.bf16.msra.mxu0 0
      %987 = vmatprep.subr.bf16.mxu0 0
      %988 = vmatpush1.bf16.msra.mxu0 0
      %989 = vmatprep.subr.bf16.mxu0 0
      %990 = vmatpush1.bf16.msra.mxu0 0
      %991 = vmatprep.subr.bf16.mxu0 0
      %992 = vmatpush1.bf16.msra.mxu0 0
      %993 = vmatprep.subr.bf16.mxu0 0
      %994 = vmatpush1.bf16.msra.mxu0 0
      %995 = vmatprep.subr.bf16.mxu0 0
      %996 = vmatpush1.bf16.msra.mxu0 0
      %997 = vmatprep.mubr.bf16.mxu0 0
      %998 = vmatmul.mubr.bf16.gmra.mrb[0].mxu0 %v907
      %v999 = vpop.f32.mrb[0].mxu0
      %v1000 = vadd.f32 0.0, %v999
      %v1001 = vpop.f32.mrb[0].mxu0
      %v1002 = vpop.f32.mrb[0].mxu0
      %v1003 = vadd.f32 0.0, %v1002
      %v1004 = vpop.f32.mrb[0].mxu0
      %1005 = vmatprep.mubr.bf16.mxu0 0
      %1006 = vmatmul.mubr.bf16.gmra.mrb[0].mxu0 %v910
      %v1007 = vpop.f32.mrb[0].mxu0
      %v1008 = vadd.f32 0.0, %v1007
      %v1009 = vpop.f32.mrb[0].mxu0
      %v1010 = vpop.f32.mrb[0].mxu0
      %v1011 = vadd.f32 0.0, %v1010
      %v1012 = vpop.f32.mrb[0].mxu0
      %1013 = vdwg.mxu0
      %v1014 = vadd.f32 %v863, %v947
      %v1015 = vadd.f32 %v864, %v949
      %v1016 = vadd.f32 %v865, %v1000
      %v1017 = vadd.f32 %v866, %v951
      %v1018 = vadd.f32 %v867, %v953
      %v1019 = vadd.f32 %v868, %v1003
      %v1020 = vadd.f32 %v869, %v957
      %v1021 = vadd.f32 %v870, %v959
      %v1022 = vadd.f32 %v871, %v1008
      %v1023 = vadd.f32 %v872, %v961
      %v1024 = vadd.f32 %v873, %v963
      %v1025 = vadd.f32 %v874, %v1011
      %1026 = vrot.lane.b32.xlu0 %v263, 127
      %v1027 = vpop.permute.xlu0 %1026
      %1028 = vrot.lane.b32.xlu0 %v266, 127
      %v1029 = vpop.permute.xlu0 %1028
      %1030 = vrot.lane.b32.xlu0 %v264, 127
      %v1031 = vpop.permute.xlu0 %1030
      %1032 = vrot.lane.b32.xlu0 %v267, 127
      %v1033 = vpop.permute.xlu0 %1032
      %1034 = vrot.lane.b32.xlu0 %v265, 127
      %v1035 = vpop.permute.xlu0 %1034
      %1036 = vrot.lane.b32.xlu0 %v268, 127
      %v1037 = vpop.permute.xlu0 %1036
      %vm1038 = vcmp.lt.s32.totalorder %v282, 127
      %v1039 = vsel %vm1038, %v1031, %v1035
      %v1040 = vsel %vm1038, %v1033, %v1037
      %v1041 = vsel %vm1038, %v1027, %v1031
      %v1042 = vsel %vm1038, %v1029, %v1033
      %v1043 = vsel %vm1038, %v1035, %v1027
      %v1044 = vsel %vm1038, %v1037, %v1029
      %v1045 = vpack.c.bf16 %v1042, %v1041
      %v1046 = vpack.c.bf16 %v1040, %v1039
      %v1047 = vpack.c.bf16 %v1044, %v1043
      %s1048 = scalar_lea.vmem %s1, 80
      %v1049 = vld [vmem:[%s1048] sm:$0xf]
      %v1050 = vld [vmem:[%s1048 + $0x4] sm:$0xf]
      %v1051 = vld [vmem:[%s1048 + $0x8] sm:$0xf]
      %v1052 = vld [vmem:[%s1048 + $0xc] sm:$0xf]
      %v1057 = vunpack.c.l.b16 %v1049
      %v1058 = vunpack.c.l.b16 %v1050
      %v1059 = vunpack.c.l.b16 %v1051
      %v1060 = vunpack.c.l.b16 %v1052
      %v1061 = vpack.c.b16 %v1058, %v1057
      %v1062 = vpack.c.b16 %v1060, %v1059
      %v1064 = vsel %vm334, %v1061, 0
      %v1067 = vsel %vm334, %v1062, 0
      %1069 = vmatprep.subr.bf16.mxu0 %v1046
      %1070 = vmatpush1.bf16.msra.mxu0 %v1045
      %1071 = vmatprep.subr.bf16.mxu0 0
      %1072 = vmatpush1.bf16.msra.mxu0 0
      %1073 = vmatprep.subr.bf16.mxu0 0
      %1074 = vmatpush1.bf16.msra.mxu0 0
      %1075 = vmatprep.subr.bf16.mxu0 0
      %1076 = vmatpush1.bf16.msra.mxu0 0
      %1077 = vmatprep.subr.bf16.mxu0 0
      %1078 = vmatpush1.bf16.msra.mxu0 0
      %1079 = vmatprep.subr.bf16.mxu0 0
      %1080 = vmatpush1.bf16.msra.mxu0 0
      %1081 = vmatprep.subr.bf16.mxu0 0
      %1082 = vmatpush1.bf16.msra.mxu0 0
      %1083 = vmatprep.subr.bf16.mxu0 0
      %1084 = vmatpush1.bf16.msra.mxu0 0
      %1085 = vmatprep.subr.bf16.mxu0 0
      %1086 = vmatpush1.bf16.msra.mxu0 0
      %1087 = vmatprep.subr.bf16.mxu0 0
      %1088 = vmatpush1.bf16.msra.mxu0 0
      %1089 = vmatprep.subr.bf16.mxu0 0
      %1090 = vmatpush1.bf16.msra.mxu0 0
      %1091 = vmatprep.subr.bf16.mxu0 0
      %1092 = vmatpush1.bf16.msra.mxu0 0
      %1093 = vmatprep.subr.bf16.mxu0 0
      %1094 = vmatpush1.bf16.msra.mxu0 0
      %1095 = vmatprep.subr.bf16.mxu0 0
      %1096 = vmatpush1.bf16.msra.mxu0 0
      %1097 = vmatprep.subr.bf16.mxu0 0
      %1098 = vmatpush1.bf16.msra.mxu0 0
      %1099 = vmatprep.subr.bf16.mxu0 0
      %1100 = vmatpush1.bf16.msra.mxu0 0
      %1101 = vmatprep.mubr.bf16.mxu0 0
      %1102 = vmatmul.mubr.bf16.gmra.mrb[0].mxu0 %v1064
      %v1103 = vpop.f32.mrb[0].mxu0
      %v1104 = vadd.f32 0.0, %v1103
      %v1105 = vpop.f32.mrb[0].mxu0
      %v1106 = vadd.f32 0.0, %v1105
      %v1107 = vpop.f32.mrb[0].mxu0
      %v1108 = vadd.f32 0.0, %v1107
      %v1109 = vpop.f32.mrb[0].mxu0
      %v1110 = vadd.f32 0.0, %v1109
      %1111 = vmatprep.mubr.bf16.mxu0 0
      %1112 = vmatmul.mubr.bf16.gmra.mrb[0].mxu0 %v1067
      %v1113 = vpop.f32.mrb[0].mxu0
      %v1114 = vadd.f32 0.0, %v1113
      %v1115 = vpop.f32.mrb[0].mxu0
      %v1116 = vadd.f32 0.0, %v1115
      %v1117 = vpop.f32.mrb[0].mxu0
      %v1118 = vadd.f32 0.0, %v1117
      %v1119 = vpop.f32.mrb[0].mxu0
      %v1120 = vadd.f32 0.0, %v1119
      %1121 = vdwg.mxu0
      %1122 = vmatprep.subr.bf16.mxu0 0
      %1123 = vmatpush1.bf16.msra.mxu0 %v1047
      %1124 = vmatprep.subr.bf16.mxu0 0
      %1125 = vmatpush1.bf16.msra.mxu0 0
      %1126 = vmatprep.subr.bf16.mxu0 0
      %1127 = vmatpush1.bf16.msra.mxu0 0
      %1128 = vmatprep.subr.bf16.mxu0 0
      %1129 = vmatpush1.bf16.msra.mxu0 0
      %1130 = vmatprep.subr.bf16.mxu0 0
      %1131 = vmatpush1.bf16.msra.mxu0 0
      %1132 = vmatprep.subr.bf16.mxu0 0
      %1133 = vmatpush1.bf16.msra.mxu0 0
      %1134 = vmatprep.subr.bf16.mxu0 0
      %1135 = vmatpush1.bf16.msra.mxu0 0
      %1136 = vmatprep.subr.bf16.mxu0 0
      %1137 = vmatpush1.bf16.msra.mxu0 0
      %1138 = vmatprep.subr.bf16.mxu0 0
      %1139 = vmatpush1.bf16.msra.mxu0 0
      %1140 = vmatprep.subr.bf16.mxu0 0
      %1141 = vmatpush1.bf16.msra.mxu0 0
      %1142 = vmatprep.subr.bf16.mxu0 0
      %1143 = vmatpush1.bf16.msra.mxu0 0
      %1144 = vmatprep.subr.bf16.mxu0 0
      %1145 = vmatpush1.bf16.msra.mxu0 0
      %1146 = vmatprep.subr.bf16.mxu0 0
      %1147 = vmatpush1.bf16.msra.mxu0 0
      %1148 = vmatprep.subr.bf16.mxu0 0
      %1149 = vmatpush1.bf16.msra.mxu0 0
      %1150 = vmatprep.subr.bf16.mxu0 0
      %1151 = vmatpush1.bf16.msra.mxu0 0
      %1152 = vmatprep.subr.bf16.mxu0 0
      %1153 = vmatpush1.bf16.msra.mxu0 0
      %1154 = vmatprep.mubr.bf16.mxu0 0
      %1155 = vmatmul.mubr.bf16.gmra.mrb[0].mxu0 %v1064
      %v1156 = vpop.f32.mrb[0].mxu0
      %v1157 = vadd.f32 0.0, %v1156
      %v1158 = vpop.f32.mrb[0].mxu0
      %v1159 = vpop.f32.mrb[0].mxu0
      %v1160 = vadd.f32 0.0, %v1159
      %v1161 = vpop.f32.mrb[0].mxu0
      %1162 = vmatprep.mubr.bf16.mxu0 0
      %1163 = vmatmul.mubr.bf16.gmra.mrb[0].mxu0 %v1067
      %v1164 = vpop.f32.mrb[0].mxu0
      %v1165 = vadd.f32 0.0, %v1164
      %v1166 = vpop.f32.mrb[0].mxu0
      %v1167 = vpop.f32.mrb[0].mxu0
      %v1168 = vadd.f32 0.0, %v1167
      %v1169 = vpop.f32.mrb[0].mxu0
      %1170 = vdwg.mxu0
      %v1171 = vadd.f32 %v1014, %v1104
      %v1172 = vadd.f32 %v1015, %v1106
      %v1173 = vadd.f32 %v1016, %v1157
      %v1174 = vadd.f32 %v1017, %v1108
      %v1175 = vadd.f32 %v1018, %v1110
      %v1176 = vadd.f32 %v1019, %v1160
      %v1177 = vadd.f32 %v1020, %v1114
      %v1178 = vadd.f32 %v1021, %v1116
      %v1179 = vadd.f32 %v1022, %v1165
      %v1180 = vadd.f32 %v1023, %v1118
      %v1181 = vadd.f32 %v1024, %v1120
      %v1182 = vadd.f32 %v1025, %v1168
      %1183 = vrot.lane.b32.xlu0 %v263, 111
      %v1184 = vpop.permute.xlu0 %1183
      %1185 = vrot.lane.b32.xlu0 %v266, 111
      %v1186 = vpop.permute.xlu0 %1185
      %1187 = vrot.lane.b32.xlu0 %v264, 111
      %v1188 = vpop.permute.xlu0 %1187
      %1189 = vrot.lane.b32.xlu0 %v267, 111
      %v1190 = vpop.permute.xlu0 %1189
      %1191 = vrot.lane.b32.xlu0 %v265, 111
      %v1192 = vpop.permute.xlu0 %1191
      %1193 = vrot.lane.b32.xlu0 %v268, 111
      %v1194 = vpop.permute.xlu0 %1193
      %vm1195 = vcmp.lt.s32.totalorder %v282, 111
      %v1196 = vsel %vm1195, %v1188, %v1192
      %v1197 = vsel %vm1195, %v1190, %v1194
      %v1198 = vsel %vm1195, %v1184, %v1188
      %v1199 = vsel %vm1195, %v1186, %v1190
      %v1200 = vsel %vm1195, %v1192, %v1184
      %v1201 = vsel %vm1195, %v1194, %v1186
      %v1202 = vpack.c.bf16 %v1199, %v1198
      %v1203 = vpack.c.bf16 %v1197, %v1196
      %v1204 = vpack.c.bf16 %v1201, %v1200
      %s1205 = scalar_lea.vmem %s1, 96
      %v1206 = vld [vmem:[%s1205] sm:$0xf]
      %v1207 = vld [vmem:[%s1205 + $0x4] sm:$0xf]
      %v1208 = vld [vmem:[%s1205 + $0x8] sm:$0xf]
      %v1209 = vld [vmem:[%s1205 + $0xc] sm:$0xf]
      %v1214 = vunpack.c.l.b16 %v1206
      %v1215 = vunpack.c.l.b16 %v1207
      %v1216 = vunpack.c.l.b16 %v1208
      %v1217 = vunpack.c.l.b16 %v1209
      %v1218 = vpack.c.b16 %v1215, %v1214
      %v1219 = vpack.c.b16 %v1217, %v1216
      %v1221 = vsel %vm334, %v1218, 0
      %v1224 = vsel %vm334, %v1219, 0
      %1226 = vmatprep.subr.bf16.mxu0 %v1203
      %1227 = vmatpush1.bf16.msra.mxu0 %v1202
      %1228 = vmatprep.subr.bf16.mxu0 0
      %1229 = vmatpush1.bf16.msra.mxu0 0
      %1230 = vmatprep.subr.bf16.mxu0 0
      %1231 = vmatpush1.bf16.msra.mxu0 0
      %1232 = vmatprep.subr.bf16.mxu0 0
      %1233 = vmatpush1.bf16.msra.mxu0 0
      %1234 = vmatprep.subr.bf16.mxu0 0
      %1235 = vmatpush1.bf16.msra.mxu0 0
      %1236 = vmatprep.subr.bf16.mxu0 0
      %1237 = vmatpush1.bf16.msra.mxu0 0
      %1238 = vmatprep.subr.bf16.mxu0 0
      %1239 = vmatpush1.bf16.msra.mxu0 0
      %1240 = vmatprep.subr.bf16.mxu0 0
      %1241 = vmatpush1.bf16.msra.mxu0 0
      %1242 = vmatprep.subr.bf16.mxu0 0
      %1243 = vmatpush1.bf16.msra.mxu0 0
      %1244 = vmatprep.subr.bf16.mxu0 0
      %1245 = vmatpush1.bf16.msra.mxu0 0
      %1246 = vmatprep.subr.bf16.mxu0 0
      %1247 = vmatpush1.bf16.msra.mxu0 0
      %1248 = vmatprep.subr.bf16.mxu0 0
      %1249 = vmatpush1.bf16.msra.mxu0 0
      %1250 = vmatprep.subr.bf16.mxu0 0
      %1251 = vmatpush1.bf16.msra.mxu0 0
      %1252 = vmatprep.subr.bf16.mxu0 0
      %1253 = vmatpush1.bf16.msra.mxu0 0
      %1254 = vmatprep.subr.bf16.mxu0 0
      %1255 = vmatpush1.bf16.msra.mxu0 0
      %1256 = vmatprep.subr.bf16.mxu0 0
      %1257 = vmatpush1.bf16.msra.mxu0 0
      %1258 = vmatprep.mubr.bf16.mxu0 0
      %1259 = vmatmul.mubr.bf16.gmra.mrb[0].mxu0 %v1221
      %v1260 = vpop.f32.mrb[0].mxu0
      %v1261 = vadd.f32 0.0, %v1260
      %v1262 = vpop.f32.mrb[0].mxu0
      %v1263 = vadd.f32 0.0, %v1262
      %v1264 = vpop.f32.mrb[0].mxu0
      %v1265 = vadd.f32 0.0, %v1264
      %v1266 = vpop.f32.mrb[0].mxu0
      %v1267 = vadd.f32 0.0, %v1266
      %1268 = vmatprep.mubr.bf16.mxu0 0
      %1269 = vmatmul.mubr.bf16.gmra.mrb[0].mxu0 %v1224
      %v1270 = vpop.f32.mrb[0].mxu0
      %v1271 = vadd.f32 0.0, %v1270
      %v1272 = vpop.f32.mrb[0].mxu0
      %v1273 = vadd.f32 0.0, %v1272
      %v1274 = vpop.f32.mrb[0].mxu0
      %v1275 = vadd.f32 0.0, %v1274
      %v1276 = vpop.f32.mrb[0].mxu0
      %v1277 = vadd.f32 0.0, %v1276
      %1278 = vdwg.mxu0
      %1279 = vmatprep.subr.bf16.mxu0 0
      %1280 = vmatpush1.bf16.msra.mxu0 %v1204
      %1281 = vmatprep.subr.bf16.mxu0 0
      %1282 = vmatpush1.bf16.msra.mxu0 0
      %1283 = vmatprep.subr.bf16.mxu0 0
      %1284 = vmatpush1.bf16.msra.mxu0 0
      %1285 = vmatprep.subr.bf16.mxu0 0
      %1286 = vmatpush1.bf16.msra.mxu0 0
      %1287 = vmatprep.subr.bf16.mxu0 0
      %1288 = vmatpush1.bf16.msra.mxu0 0
      %1289 = vmatprep.subr.bf16.mxu0 0
      %1290 = vmatpush1.bf16.msra.mxu0 0
      %1291 = vmatprep.subr.bf16.mxu0 0
      %1292 = vmatpush1.bf16.msra.mxu0 0
      %1293 = vmatprep.subr.bf16.mxu0 0
      %1294 = vmatpush1.bf16.msra.mxu0 0
      %1295 = vmatprep.subr.bf16.mxu0 0
      %1296 = vmatpush1.bf16.msra.mxu0 0
      %1297 = vmatprep.subr.bf16.mxu0 0
      %1298 = vmatpush1.bf16.msra.mxu0 0
      %1299 = vmatprep.subr.bf16.mxu0 0
      %1300 = vmatpush1.bf16.msra.mxu0 0
      %1301 = vmatprep.subr.bf16.mxu0 0
      %1302 = vmatpush1.bf16.msra.mxu0 0
      %1303 = vmatprep.subr.bf16.mxu0 0
      %1304 = vmatpush1.bf16.msra.mxu0 0
      %1305 = vmatprep.subr.bf16.mxu0 0
      %1306 = vmatpush1.bf16.msra.mxu0 0
      %1307 = vmatprep.subr.bf16.mxu0 0
      %1308 = vmatpush1.bf16.msra.mxu0 0
      %1309 = vmatprep.subr.bf16.mxu0 0
      %1310 = vmatpush1.bf16.msra.mxu0 0
      %1311 = vmatprep.mubr.bf16.mxu0 0
      %1312 = vmatmul.mubr.bf16.gmra.mrb[0].mxu0 %v1221
      %v1313 = vpop.f32.mrb[0].mxu0
      %v1314 = vadd.f32 0.0, %v1313
      %v1315 = vpop.f32.mrb[0].mxu0
      %v1316 = vpop.f32.mrb[0].mxu0
      %v1317 = vadd.f32 0.0, %v1316
      %v1318 = vpop.f32.mrb[0].mxu0
      %1319 = vmatprep.mubr.bf16.mxu0 0
      %1320 = vmatmul.mubr.bf16.gmra.mrb[0].mxu0 %v1224
      %v1321 = vpop.f32.mrb[0].mxu0
      %v1322 = vadd.f32 0.0, %v1321
      %v1323 = vpop.f32.mrb[0].mxu0
      %v1324 = vpop.f32.mrb[0].mxu0
      %v1325 = vadd.f32 0.0, %v1324
      %v1326 = vpop.f32.mrb[0].mxu0
      %1327 = vdwg.mxu0
      %v1328 = vadd.f32 %v1171, %v1261
      %v1329 = vadd.f32 %v1172, %v1263
      %v1330 = vadd.f32 %v1173, %v1314
      %v1331 = vadd.f32 %v1174, %v1265
      %v1332 = vadd.f32 %v1175, %v1267
      %v1333 = vadd.f32 %v1176, %v1317
      %v1334 = vadd.f32 %v1177, %v1271
      %v1335 = vadd.f32 %v1178, %v1273
      %v1336 = vadd.f32 %v1179, %v1322
      %v1337 = vadd.f32 %v1180, %v1275
      %v1338 = vadd.f32 %v1181, %v1277
      %v1339 = vadd.f32 %v1182, %v1325
      %1340 = vrot.lane.b32.xlu0 %v263, 110
      %v1341 = vpop.permute.xlu0 %1340
      %1342 = vrot.lane.b32.xlu0 %v266, 110
      %v1343 = vpop.permute.xlu0 %1342
      %1344 = vrot.lane.b32.xlu0 %v264, 110
      %v1345 = vpop.permute.xlu0 %1344
      %1346 = vrot.lane.b32.xlu0 %v267, 110
      %v1347 = vpop.permute.xlu0 %1346
      %1348 = vrot.lane.b32.xlu0 %v265, 110
      %v1349 = vpop.permute.xlu0 %1348
      %1350 = vrot.lane.b32.xlu0 %v268, 110
      %v1351 = vpop.permute.xlu0 %1350
      %vm1352 = vcmp.lt.s32.totalorder %v282, 110
      %v1353 = vsel %vm1352, %v1345, %v1349
      %v1354 = vsel %vm1352, %v1347, %v1351
      %v1355 = vsel %vm1352, %v1341, %v1345
      %v1356 = vsel %vm1352, %v1343, %v1347
      %v1357 = vsel %vm1352, %v1349, %v1341
      %v1358 = vsel %vm1352, %v1351, %v1343
      %v1359 = vpack.c.bf16 %v1356, %v1355
      %v1360 = vpack.c.bf16 %v1354, %v1353
      %v1361 = vpack.c.bf16 %v1358, %v1357
      %s1362 = scalar_lea.vmem %s1, 112
      %v1363 = vld [vmem:[%s1362] sm:$0xf]
      %v1364 = vld [vmem:[%s1362 + $0x4] sm:$0xf]
      %v1365 = vld [vmem:[%s1362 + $0x8] sm:$0xf]
      %v1366 = vld [vmem:[%s1362 + $0xc] sm:$0xf]
      %v1371 = vunpack.c.l.b16 %v1363
      %v1372 = vunpack.c.l.b16 %v1364
      %v1373 = vunpack.c.l.b16 %v1365
      %v1374 = vunpack.c.l.b16 %v1366
      %v1375 = vpack.c.b16 %v1372, %v1371
      %v1376 = vpack.c.b16 %v1374, %v1373
      %v1378 = vsel %vm334, %v1375, 0
      %v1381 = vsel %vm334, %v1376, 0
      %1383 = vmatprep.subr.bf16.mxu0 %v1360
      %1384 = vmatpush1.bf16.msra.mxu0 %v1359
      %1385 = vmatprep.subr.bf16.mxu0 0
      %1386 = vmatpush1.bf16.msra.mxu0 0
      %1387 = vmatprep.subr.bf16.mxu0 0
      %1388 = vmatpush1.bf16.msra.mxu0 0
      %1389 = vmatprep.subr.bf16.mxu0 0
      %1390 = vmatpush1.bf16.msra.mxu0 0
      %1391 = vmatprep.subr.bf16.mxu0 0
      %1392 = vmatpush1.bf16.msra.mxu0 0
      %1393 = vmatprep.subr.bf16.mxu0 0
      %1394 = vmatpush1.bf16.msra.mxu0 0
      %1395 = vmatprep.subr.bf16.mxu0 0
      %1396 = vmatpush1.bf16.msra.mxu0 0
      %1397 = vmatprep.subr.bf16.mxu0 0
      %1398 = vmatpush1.bf16.msra.mxu0 0
      %1399 = vmatprep.subr.bf16.mxu0 0
      %1400 = vmatpush1.bf16.msra.mxu0 0
      %1401 = vmatprep.subr.bf16.mxu0 0
      %1402 = vmatpush1.bf16.msra.mxu0 0
      %1403 = vmatprep.subr.bf16.mxu0 0
      %1404 = vmatpush1.bf16.msra.mxu0 0
      %1405 = vmatprep.subr.bf16.mxu0 0
      %1406 = vmatpush1.bf16.msra.mxu0 0
      %1407 = vmatprep.subr.bf16.mxu0 0
      %1408 = vmatpush1.bf16.msra.mxu0 0
      %1409 = vmatprep.subr.bf16.mxu0 0
      %1410 = vmatpush1.bf16.msra.mxu0 0
      %1411 = vmatprep.subr.bf16.mxu0 0
      %1412 = vmatpush1.bf16.msra.mxu0 0
      %1413 = vmatprep.subr.bf16.mxu0 0
      %1414 = vmatpush1.bf16.msra.mxu0 0
      %1415 = vmatprep.mubr.bf16.mxu0 0
      %1416 = vmatmul.mubr.bf16.gmra.mrb[0].mxu0 %v1378
      %v1417 = vpop.f32.mrb[0].mxu0
      %v1418 = vadd.f32 0.0, %v1417
      %v1419 = vpop.f32.mrb[0].mxu0
      %v1420 = vadd.f32 0.0, %v1419
      %v1421 = vpop.f32.mrb[0].mxu0
      %v1422 = vadd.f32 0.0, %v1421
      %v1423 = vpop.f32.mrb[0].mxu0
      %v1424 = vadd.f32 0.0, %v1423
      %1425 = vmatprep.mubr.bf16.mxu0 0
      %1426 = vmatmul.mubr.bf16.gmra.mrb[0].mxu0 %v1381
      %v1427 = vpop.f32.mrb[0].mxu0
      %v1428 = vadd.f32 0.0, %v1427
      %v1429 = vpop.f32.mrb[0].mxu0
      %v1430 = vadd.f32 0.0, %v1429
      %v1431 = vpop.f32.mrb[0].mxu0
      %v1432 = vadd.f32 0.0, %v1431
      %v1433 = vpop.f32.mrb[0].mxu0
      %v1434 = vadd.f32 0.0, %v1433
      %1435 = vdwg.mxu0
      %1436 = vmatprep.subr.bf16.mxu0 0
      %1437 = vmatpush1.bf16.msra.mxu0 %v1361
      %1438 = vmatprep.subr.bf16.mxu0 0
      %1439 = vmatpush1.bf16.msra.mxu0 0
      %1440 = vmatprep.subr.bf16.mxu0 0
      %1441 = vmatpush1.bf16.msra.mxu0 0
      %1442 = vmatprep.subr.bf16.mxu0 0
      %1443 = vmatpush1.bf16.msra.mxu0 0
      %1444 = vmatprep.subr.bf16.mxu0 0
      %1445 = vmatpush1.bf16.msra.mxu0 0
      %1446 = vmatprep.subr.bf16.mxu0 0
      %1447 = vmatpush1.bf16.msra.mxu0 0
      %1448 = vmatprep.subr.bf16.mxu0 0
      %1449 = vmatpush1.bf16.msra.mxu0 0
      %1450 = vmatprep.subr.bf16.mxu0 0
      %1451 = vmatpush1.bf16.msra.mxu0 0
      %1452 = vmatprep.subr.bf16.mxu0 0
      %1453 = vmatpush1.bf16.msra.mxu0 0
      %1454 = vmatprep.subr.bf16.mxu0 0
      %1455 = vmatpush1.bf16.msra.mxu0 0
      %1456 = vmatprep.subr.bf16.mxu0 0
      %1457 = vmatpush1.bf16.msra.mxu0 0
      %1458 = vmatprep.subr.bf16.mxu0 0
      %1459 = vmatpush1.bf16.msra.mxu0 0
      %1460 = vmatprep.subr.bf16.mxu0 0
      %1461 = vmatpush1.bf16.msra.mxu0 0
      %1462 = vmatprep.subr.bf16.mxu0 0
      %1463 = vmatpush1.bf16.msra.mxu0 0
      %1464 = vmatprep.subr.bf16.mxu0 0
      %1465 = vmatpush1.bf16.msra.mxu0 0
      %1466 = vmatprep.subr.bf16.mxu0 0
      %1467 = vmatpush1.bf16.msra.mxu0 0
      %1468 = vmatprep.mubr.bf16.mxu0 0
      %1469 = vmatmul.mubr.bf16.gmra.mrb[0].mxu0 %v1378
      %v1470 = vpop.f32.mrb[0].mxu0
      %v1471 = vadd.f32 0.0, %v1470
      %v1472 = vpop.f32.mrb[0].mxu0
      %v1473 = vpop.f32.mrb[0].mxu0
      %v1474 = vadd.f32 0.0, %v1473
      %v1475 = vpop.f32.mrb[0].mxu0
      %1476 = vmatprep.mubr.bf16.mxu0 0
      %1477 = vmatmul.mubr.bf16.gmra.mrb[0].mxu0 %v1381
      %v1478 = vpop.f32.mrb[0].mxu0
      %v1479 = vadd.f32 0.0, %v1478
      %v1480 = vpop.f32.mrb[0].mxu0
      %v1481 = vpop.f32.mrb[0].mxu0
      %v1482 = vadd.f32 0.0, %v1481
      %v1483 = vpop.f32.mrb[0].mxu0
      %1484 = vdwg.mxu0
      %v1485 = vadd.f32 %v1328, %v1418
      %v1486 = vadd.f32 %v1329, %v1420
      %v1487 = vadd.f32 %v1330, %v1471
      %v1488 = vadd.f32 %v1331, %v1422
      %v1489 = vadd.f32 %v1332, %v1424
      %v1490 = vadd.f32 %v1333, %v1474
      %v1491 = vadd.f32 %v1334, %v1428
      %v1492 = vadd.f32 %v1335, %v1430
      %v1493 = vadd.f32 %v1336, %v1479
      %v1494 = vadd.f32 %v1337, %v1432
      %v1495 = vadd.f32 %v1338, %v1434
      %v1496 = vadd.f32 %v1339, %v1482
      %1497 = vrot.lane.b32.xlu0 %v263, 109
      %v1498 = vpop.permute.xlu0 %1497
      %1499 = vrot.lane.b32.xlu0 %v266, 109
      %v1500 = vpop.permute.xlu0 %1499
      %1501 = vrot.lane.b32.xlu0 %v264, 109
      %v1502 = vpop.permute.xlu0 %1501
      %1503 = vrot.lane.b32.xlu0 %v267, 109
      %v1504 = vpop.permute.xlu0 %1503
      %1505 = vrot.lane.b32.xlu0 %v265, 109
      %v1506 = vpop.permute.xlu0 %1505
      %1507 = vrot.lane.b32.xlu0 %v268, 109
      %v1508 = vpop.permute.xlu0 %1507
      %vm1509 = vcmp.lt.s32.totalorder %v282, 109
      %v1510 = vsel %vm1509, %v1502, %v1506
      %v1511 = vsel %vm1509, %v1504, %v1508
      %v1512 = vsel %vm1509, %v1498, %v1502
      %v1513 = vsel %vm1509, %v1500, %v1504
      %v1514 = vsel %vm1509, %v1506, %v1498
      %v1515 = vsel %vm1509, %v1508, %v1500
      %v1516 = vpack.c.bf16 %v1513, %v1512
      %v1517 = vpack.c.bf16 %v1511, %v1510
      %v1518 = vpack.c.bf16 %v1515, %v1514
      %s1519 = scalar_lea.vmem %s1, 128
      %v1520 = vld [vmem:[%s1519] sm:$0xf]
      %v1521 = vld [vmem:[%s1519 + $0x4] sm:$0xf]
      %v1522 = vld [vmem:[%s1519 + $0x8] sm:$0xf]
      %v1523 = vld [vmem:[%s1519 + $0xc] sm:$0xf]
      %v1528 = vunpack.c.l.b16 %v1520
      %v1529 = vunpack.c.l.b16 %v1521
      %v1530 = vunpack.c.l.b16 %v1522
      %v1531 = vunpack.c.l.b16 %v1523
      %v1532 = vpack.c.b16 %v1529, %v1528
      %v1533 = vpack.c.b16 %v1531, %v1530
      %v1535 = vsel %vm334, %v1532, 0
      %v1538 = vsel %vm334, %v1533, 0
      %1540 = vmatprep.subr.bf16.mxu0 %v1517
      %1541 = vmatpush1.bf16.msra.mxu0 %v1516
      %1542 = vmatprep.subr.bf16.mxu0 0
      %1543 = vmatpush1.bf16.msra.mxu0 0
      %1544 = vmatprep.subr.bf16.mxu0 0
      %1545 = vmatpush1.bf16.msra.mxu0 0
      %1546 = vmatprep.subr.bf16.mxu0 0
      %1547 = vmatpush1.bf16.msra.mxu0 0
      %1548 = vmatprep.subr.bf16.mxu0 0
      %1549 = vmatpush1.bf16.msra.mxu0 0
      %1550 = vmatprep.subr.bf16.mxu0 0
      %1551 = vmatpush1.bf16.msra.mxu0 0
      %1552 = vmatprep.subr.bf16.mxu0 0
      %1553 = vmatpush1.bf16.msra.mxu0 0
      %1554 = vmatprep.subr.bf16.mxu0 0
      %1555 = vmatpush1.bf16.msra.mxu0 0
      %1556 = vmatprep.subr.bf16.mxu0 0
      %1557 = vmatpush1.bf16.msra.mxu0 0
      %1558 = vmatprep.subr.bf16.mxu0 0
      %1559 = vmatpush1.bf16.msra.mxu0 0
      %1560 = vmatprep.subr.bf16.mxu0 0
      %1561 = vmatpush1.bf16.msra.mxu0 0
      %1562 = vmatprep.subr.bf16.mxu0 0
      %1563 = vmatpush1.bf16.msra.mxu0 0
      %1564 = vmatprep.subr.bf16.mxu0 0
      %1565 = vmatpush1.bf16.msra.mxu0 0
      %1566 = vmatprep.subr.bf16.mxu0 0
      %1567 = vmatpush1.bf16.msra.mxu0 0
      %1568 = vmatprep.subr.bf16.mxu0 0
      %1569 = vmatpush1.bf16.msra.mxu0 0
      %1570 = vmatprep.subr.bf16.mxu0 0
      %1571 = vmatpush1.bf16.msra.mxu0 0
      %1572 = vmatprep.mubr.bf16.mxu0 0
      %1573 = vmatmul.mubr.bf16.gmra.mrb[0].mxu0 %v1535
      %v1574 = vpop.f32.mrb[0].mxu0
      %v1575 = vadd.f32 0.0, %v1574
      %v1576 = vpop.f32.mrb[0].mxu0
      %v1577 = vadd.f32 0.0, %v1576
      %v1578 = vpop.f32.mrb[0].mxu0
      %v1579 = vadd.f32 0.0, %v1578
      %v1580 = vpop.f32.mrb[0].mxu0
      %v1581 = vadd.f32 0.0, %v1580
      %1582 = vmatprep.mubr.bf16.mxu0 0
      %1583 = vmatmul.mubr.bf16.gmra.mrb[0].mxu0 %v1538
      %v1584 = vpop.f32.mrb[0].mxu0
      %v1585 = vadd.f32 0.0, %v1584
      %v1586 = vpop.f32.mrb[0].mxu0
      %v1587 = vadd.f32 0.0, %v1586
      %v1588 = vpop.f32.mrb[0].mxu0
      %v1589 = vadd.f32 0.0, %v1588
      %v1590 = vpop.f32.mrb[0].mxu0
      %v1591 = vadd.f32 0.0, %v1590
      %1592 = vdwg.mxu0
      %1593 = vmatprep.subr.bf16.mxu0 0
      %1594 = vmatpush1.bf16.msra.mxu0 %v1518
      %1595 = vmatprep.subr.bf16.mxu0 0
      %1596 = vmatpush1.bf16.msra.mxu0 0
      %1597 = vmatprep.subr.bf16.mxu0 0
      %1598 = vmatpush1.bf16.msra.mxu0 0
      %1599 = vmatprep.subr.bf16.mxu0 0
      %1600 = vmatpush1.bf16.msra.mxu0 0
      %1601 = vmatprep.subr.bf16.mxu0 0
      %1602 = vmatpush1.bf16.msra.mxu0 0
      %1603 = vmatprep.subr.bf16.mxu0 0
      %1604 = vmatpush1.bf16.msra.mxu0 0
      %1605 = vmatprep.subr.bf16.mxu0 0
      %1606 = vmatpush1.bf16.msra.mxu0 0
      %1607 = vmatprep.subr.bf16.mxu0 0
      %1608 = vmatpush1.bf16.msra.mxu0 0
      %1609 = vmatprep.subr.bf16.mxu0 0
      %1610 = vmatpush1.bf16.msra.mxu0 0
      %1611 = vmatprep.subr.bf16.mxu0 0
      %1612 = vmatpush1.bf16.msra.mxu0 0
      %1613 = vmatprep.subr.bf16.mxu0 0
      %1614 = vmatpush1.bf16.msra.mxu0 0
      %1615 = vmatprep.subr.bf16.mxu0 0
      %1616 = vmatpush1.bf16.msra.mxu0 0
      %1617 = vmatprep.subr.bf16.mxu0 0
      %1618 = vmatpush1.bf16.msra.mxu0 0
      %1619 = vmatprep.subr.bf16.mxu0 0
      %1620 = vmatpush1.bf16.msra.mxu0 0
      %1621 = vmatprep.subr.bf16.mxu0 0
      %1622 = vmatpush1.bf16.msra.mxu0 0
      %1623 = vmatprep.subr.bf16.mxu0 0
      %1624 = vmatpush1.bf16.msra.mxu0 0
      %1625 = vmatprep.mubr.bf16.mxu0 0
      %1626 = vmatmul.mubr.bf16.gmra.mrb[0].mxu0 %v1535
      %v1627 = vpop.f32.mrb[0].mxu0
      %v1628 = vadd.f32 0.0, %v1627
      %v1629 = vpop.f32.mrb[0].mxu0
      %v1630 = vpop.f32.mrb[0].mxu0
      %v1631 = vadd.f32 0.0, %v1630
      %v1632 = vpop.f32.mrb[0].mxu0
      %1633 = vmatprep.mubr.bf16.mxu0 0
      %1634 = vmatmul.mubr.bf16.gmra.mrb[0].mxu0 %v1538
      %v1635 = vpop.f32.mrb[0].mxu0
      %v1636 = vadd.f32 0.0, %v1635
      %v1637 = vpop.f32.mrb[0].mxu0
      %v1638 = vpop.f32.mrb[0].mxu0
      %v1639 = vadd.f32 0.0, %v1638
      %v1640 = vpop.f32.mrb[0].mxu0
      %1641 = vdwg.mxu0
      %v1642 = vadd.f32 %v1485, %v1575
      %v1643 = vadd.f32 %v1486, %v1577
      %v1644 = vadd.f32 %v1487, %v1628
      %v1645 = vadd.f32 %v1488, %v1579
      %v1646 = vadd.f32 %v1489, %v1581
      %v1647 = vadd.f32 %v1490, %v1631
      %v1648 = vadd.f32 %v1491, %v1585
      %v1649 = vadd.f32 %v1492, %v1587
      %v1650 = vadd.f32 %v1493, %v1636
      %v1651 = vadd.f32 %v1494, %v1589
      %v1652 = vadd.f32 %v1495, %v1591
      %v1653 = vadd.f32 %v1496, %v1639
      %v1654 = vld [vmem:[%s2] sm:$0xff]
      %v1655 = vld [vmem:[%s2 + $0x8] sm:$0xff]
      %v1656 = vld [vmem:[%s2 + $0x10] sm:$0xff]
      %v1657 = vld [vmem:[%s2 + $0x18] sm:$0xff]
      %1659 = vset.pattern.permute.xlu0 0
      %1660 = vperm.xlu0 %1659, %v1654
      %v1661 = vpop.permute.xlu0 %1660
      %1664 = vset.pattern.permute.xlu0 0
      %1665 = vperm.xlu0 %1664, %v1655
      %v1666 = vpop.permute.xlu0 %1665
      %1669 = vset.pattern.permute.xlu0 0
      %1670 = vperm.xlu0 %1669, %v1656
      %v1671 = vpop.permute.xlu0 %1670
      %1674 = vset.pattern.permute.xlu0 0
      %1675 = vperm.xlu0 %1674, %v1657
      %v1676 = vpop.permute.xlu0 %1675
      %v1678 = vadd.f32 %v1642, %v1661
      %v1679 = vadd.f32 %v1643, %v1661
      %v1680 = vadd.f32 %v1644, %v1661
      %v1681 = vadd.f32 %v1645, %v1666
      %v1682 = vadd.f32 %v1646, %v1666
      %v1683 = vadd.f32 %v1647, %v1666
      %v1684 = vadd.f32 %v1648, %v1671
      %v1685 = vadd.f32 %v1649, %v1671
      %v1686 = vadd.f32 %v1650, %v1671
      %v1687 = vadd.f32 %v1651, %v1676
      %v1688 = vadd.f32 %v1652, %v1676
      %v1689 = vadd.f32 %v1653, %v1676
      %v1690 = vxor.u32 %v1678, 2147483648
      %v1691 = vxor.u32 %v1679, 2147483648
      %v1692 = vxor.u32 %v1680, 2147483648
      %v1693 = vxor.u32 %v1681, 2147483648
      %v1694 = vxor.u32 %v1682, 2147483648
      %v1695 = vxor.u32 %v1683, 2147483648
      %v1696 = vxor.u32 %v1684, 2147483648
      %v1697 = vxor.u32 %v1685, 2147483648
      %v1698 = vxor.u32 %v1686, 2147483648
      %v1699 = vmul.f32 %v1690, 1.442695
      %v1700 = vpow.pop %v1699
      %v1701 = vmul.f32 %v1691, 1.442695
      %v1702 = vpow.pop %v1701
      %v1703 = vmul.f32 %v1692, 1.442695
      %v1704 = vpow.pop %v1703
      %v1705 = vmul.f32 %v1693, 1.442695
      %v1706 = vpow.pop %v1705
      %v1707 = vmul.f32 %v1694, 1.442695
      %v1708 = vpow.pop %v1707
      %v1709 = vmul.f32 %v1695, 1.442695
      %v1710 = vpow.pop %v1709
      %v1711 = vmul.f32 %v1696, 1.442695
      %v1712 = vpow.pop %v1711
      %v1713 = vmul.f32 %v1697, 1.442695
      %v1714 = vpow.pop %v1713
      %v1715 = vmul.f32 %v1698, 1.442695
      %v1716 = vpow.pop %v1715
      %v1717 = vadd.f32 %v1700, 1.0
      %v1718 = vadd.f32 %v1702, 1.0
      %v1719 = vadd.f32 %v1704, 1.0
      %v1720 = vadd.f32 %v1706, 1.0
      %v1721 = vadd.f32 %v1708, 1.0
      %v1722 = vadd.f32 %v1710, 1.0
      %v1723 = vadd.f32 %v1712, 1.0
      %v1724 = vadd.f32 %v1714, 1.0
      %v1725 = vadd.f32 %v1716, 1.0
      %v1726 = vrcp.pop %v1717
      %v1727 = vmul.f32 1.0, %v1726
      %v1728 = vrcp.pop %v1718
      %v1729 = vmul.f32 1.0, %v1728
      %v1730 = vrcp.pop %v1719
      %v1731 = vmul.f32 1.0, %v1730
      %v1732 = vrcp.pop %v1720
      %v1733 = vmul.f32 1.0, %v1732
      %v1734 = vrcp.pop %v1721
      %v1735 = vmul.f32 1.0, %v1734
      %v1736 = vrcp.pop %v1722
      %v1737 = vmul.f32 1.0, %v1736
      %v1738 = vrcp.pop %v1723
      %v1739 = vmul.f32 1.0, %v1738
      %v1740 = vrcp.pop %v1724
      %v1741 = vmul.f32 1.0, %v1740
      %v1742 = vrcp.pop %v1725
      %v1743 = vmul.f32 1.0, %v1742
      %v1744 = vtanh.pop %v1687
      %v1745 = vtanh.pop %v1688
      %v1746 = vtanh.pop %v1689
      %v1747 = vld [vmem:[%s247] sm:$0xff]
      %v1748 = vld [vmem:[%s247 + $0x8] sm:$0xff]
      %v1749 = vld [vmem:[%s247 + $0x10] sm:$0xff]
      %v1750 = vmul.f32 %v1733, %v1747
      %v1751 = vmul.f32 %v1735, %v1748
      %v1752 = vmul.f32 %v1737, %v1749
      %v1753 = vmul.f32 %v1727, %v1744
      %v1754 = vmul.f32 %v1729, %v1745
      %v1755 = vmul.f32 %v1731, %v1746
      %v1756 = vadd.f32 %v1750, %v1753
      %v1757 = vadd.f32 %v1751, %v1754
      %v1758 = vadd.f32 %v1752, %v1755
      %v1759 = vtanh.pop %v1756
      %v1760 = vtanh.pop %v1757
      %v1761 = vtanh.pop %v1758
      %v1762 = vmul.f32 %v1739, %v1759
      %v1763 = vmul.f32 %v1741, %v1760
      %v1764 = vmul.f32 %v1743, %v1761
      %1765 = vst [vmem:[%s257] sm:$0xff] %v1756
      %1766 = vst [vmem:[%s257 + $0x8] sm:$0xff] %v1757
      %1767 = vst [vmem:[%s257 + $0x10] sm:$0xff] %v1758
      %v1768 = vpack.c.bf16 %v1762, %v1762
      %v1769 = vpack.c.bf16 %v1763, %v1763
      %v1770 = vpack.c.bf16 %v1764, %v1764
      %v1774 = vunpack.c.l.b16 %v1768
      %v1775 = vunpack.c.l.b16 %v1769
      %v1776 = vunpack.c.l.b16 %v1770
      %v1777 = vpack.c.b16 %v1775, %v1774
      %v1778 = vpack.c.b16 %v1776, %v1776
      %1781 = vst [vmem:[%s252] sm:$0xff] %v1777
      %1782 = vst [vmem:[%s252 + $0x8] sm:$0xf] %v1778
      %p1783 = scmp.lt.s32.totalorder %s17, 1
      %s1784 = scalar_select %p1783, %s17, 1
      %s1785 = smul.addr %s1784, 3
      %s1786 = smul.addr %s1785, 4
      %s1787 = scalar_lea.vmem %s4, %s1786
      %p1788 = scmp.lt.s32.totalorder %s17, 1
      %s1789 = scalar_select %p1788, %s17, 1
      %s1790 = smul.addr %s1789, 3
      %s1791 = smul.addr %s1790, 8
      %s1792 = scalar_lea.vmem %s5, %s1791
      // Predicated region
      $region37: #{convlstm_cell_forward.1} parent=35 // pred_check
        %p1793 = pneg %p129
      $region38: #{convlstm_cell_forward.1} parent=35 // pred_check_branch
        %1795 = sbr.rel (%p1793) target = $region40
      $region39: #{convlstm_cell_forward.1} parent=35 // pred_region
        _
      $region40: #{convlstm_cell_forward.1} parent=35 // pred_fallthru
        _
      // Predicated region
      $region41: #{convlstm_cell_forward.1} parent=35 // pred_check
        %p1796 = pneg %p155
      $region42: #{convlstm_cell_forward.1} parent=35 // pred_check_branch
        %1798 = sbr.rel (%p1796) target = $region44
      $region43: #{convlstm_cell_forward.1} parent=35 // pred_region
        _
      $region44: #{convlstm_cell_forward.1} parent=35 // pred_fallthru
        _
    $region36: #{convlstm_cell_forward.1} parent=5 // pred_fallthru
      _
    %p1799 = scmp.le.s32.totalorder 2, %s12
    // Predicated region
    $region45: #{convlstm_cell_forward.1} parent=5 // pred_check
      %p1800 = pneg %p1799
    $region46: #{convlstm_cell_forward.1} parent=5 // pred_check_branch
      %1802 = sbr.rel (%p1800) target = $region48
    $region47: #{convlstm_cell_forward.1} parent=5 // pred_region
      %s1803 = ssub.s32 %s12, 2
      // Predicated region
      $region49: #{convlstm_cell_forward.1} parent=47 // pred_check
        %p1804 = pneg %p135
      $region50: #{convlstm_cell_forward.1} parent=47 // pred_check_branch
        %1806 = sbr.rel (%p1804) target = $region52
      $region51: #{convlstm_cell_forward.1} parent=47 // pred_region
        %p1807 = scmp.lt.s32.totalorder %s18, 1
        %s1808 = scalar_select %p1807, %s18, 1
        %s1809 = smul.addr %s1808, 3
        %s1810 = smul.addr %s1809, 4
        %s1811 = scalar_lea.vmem %s4, %s1810
      $region52: #{convlstm_cell_forward.1} parent=47 // pred_fallthru
        _
      // Predicated region
      $region53: #{convlstm_cell_forward.1} parent=47 // pred_check
        %p1812 = pneg %p161
      $region54: #{convlstm_cell_forward.1} parent=47 // pred_check_branch
        %1814 = sbr.rel (%p1812) target = $region56
      $region55: #{convlstm_cell_forward.1} parent=47 // pred_region
        %p1815 = scmp.lt.s32.totalorder %s18, 1
        %s1816 = scalar_select %p1815, %s18, 1
        %s1817 = smul.addr %s1816, 3
        %s1818 = smul.addr %s1817, 8
        %s1819 = scalar_lea.vmem %s5, %s1818
      $region56: #{convlstm_cell_forward.1} parent=47 // pred_fallthru
        _
    $region48: #{convlstm_cell_forward.1} parent=5 // pred_fallthru
      _
  $region6: #{convlstm_cell_forward.1} parent=0 // loop_footer
    %s16 = sadd.s32 1, %s12
  $region7: #{convlstm_cell_forward.1} parent=0 // loop_footer_branch
    %11 = sbr.rel target = $region3
  $region8: #{convlstm_cell_forward.1} parent=0 // loop_exit
    _

</llo_original>
